<compile_context>
chip_gen: v7x
topology: tpu7x:2x2x1
jax: 0.10.0
libtpu: 0.0.40
codegen_flags: <defaults>
</compile_context>

<pallas_src>
import jax
import jax.numpy as jnp
from jax.experimental import pallas as pl
from jax.experimental.pallas import tpu as pltpu

SIGMA = 0.3   # hard-coded in SDCN.forward
LANES = 128   # TPU lane width; all packed column offsets are multiples of this


def _round_up(x, m):
    return -(-x // m) * m


def _pack_cols(mats, dtype, align=LANES):
    """Lane-concatenate same-row-count matrices at align-aligned column offsets."""
    pieces, offs, c = [], [], 0
    for m in mats:
        w = int(m.shape[1])
        pw = _round_up(w, align)
        pieces.append(jnp.pad(m.astype(dtype), ((0, 0), (0, pw - w))))
        offs.append(c)
        c += pw
    return jnp.concatenate(pieces, axis=1), offs


def _conv_shift_weights(w0, w1, L):
    """Weight-embedded shift matrices for the k=3 / pad=1 1-D convolutions.

    W_conv[v*L + l', l]   = w0[v, l'-l+1]  if 0 <= l'-l+1 <= 2 else 0
    W_deconv[l', v*L + l] = w1[v, l'-l+1]  if 0 <= l'-l+1 <= 2 else 0
    """
    V = w0.shape[0]
    lp = jnp.arange(L)[:, None]          # l'
    lc = jnp.arange(L)[None, :]          # l
    k = lp - lc + 1                      # (L, L)
    valid = ((k >= 0) & (k <= 2)).astype(jnp.float32)
    kc = jnp.clip(k, 0, 2)
    wc = (w0[:, kc] * valid[None]).reshape(V * L, L)                          # (V*L, L)
    wd = jnp.transpose(w1[:, kc] * valid[None], (1, 0, 2)).reshape(L, V * L)  # (L, V*L)
    return wc, wd


# ----------------------------------------------------------------------------
# Wrapper (layout plumbing) + kernel (closes over static packing offsets)
# ----------------------------------------------------------------------------
def sdcn_forward(x, adj, p):
    """x: (N, V, L) float32, adj: (N, N) float32, p: dict of parameters."""
    N, V, L = x.shape
    n_enc1 = int(p["e1_w"].shape[1])
    n_z = int(p["z_w"].shape[1])
    n_clusters = int(p["fc_w"].shape[1])
    f32, bf16 = jnp.float32, jnp.bfloat16

    # ---- pre-kernel layout plumbing (plain XLA) -----------------------------
    x_flat = x.reshape(N, V * L).astype(bf16)             # lane-dense conv input
    adj_b = adj.astype(bf16)
    wc, wd = _conv_shift_weights(p["w0"], p["w1"], L)
    wc = wc.astype(bf16)
    b1_flat = jnp.repeat(p["b1"], L).reshape(1, V * L)

    # enc_1 and gnn_1 share the same left operand (pro_x): fuse the weights.
    eg1 = jnp.concatenate([p["e1_w"], p["g1_w"]], axis=1)  # (L, 2*n_enc1)

    weight_list = [
        ("eg1", eg1), ("e2", p["e2_w"]), ("e3", p["e3_w"]), ("z", p["z_w"]),
        ("d1", p["d1_w"]), ("d2", p["d2_w"]), ("d3", p["d3_w"]), ("xb", p["xb_w"]),
        ("g2", p["g2_w"]), ("g3", p["g3_w"]), ("g4", p["g4_w"]),
        ("fc", p["fc_w"]), ("wd", wd),
    ]
    groups = {}                                             # rows -> [(name, mat)]
    for name, m in weight_list:
        groups.setdefault(int(m.shape[0]), []).append((name, m))
    row_keys = sorted(groups)
    slabs, wloc = [], {}                                    # name -> (slab_idx, off, width)
    for si, r in enumerate(row_keys):
        slab, offs = _pack_cols([m for _, m in groups[r]], bf16)
        slabs.append(slab)
        for (name, m), off in zip(groups[r], offs):
            wloc[name] = (si, off, int(m.shape[1]))

    bias_list = [
        ("e1", p["e1_b"]), ("e2", p["e2_b"]), ("e3", p["e3_b"]), ("z", p["z_b"]),
        ("d1", p["d1_b"]), ("d2", p["d2_b"]), ("d3", p["d3_b"]), ("xb", p["xb_b"]),
        ("fc", p["fc_b"]), ("b1", b1_flat),
    ]
    bias_slab, boffs = _pack_cols([m for _, m in bias_list], f32)
    bloc = {name: (off, int(m.shape[1]))
            for (name, m), off in zip(bias_list, boffs)}

    n_slabs = len(slabs)
    xbar_pad = _round_up(V * L, LANES)
    tail_w = n_clusters + n_z + L
    tail_pad = _round_up(tail_w, LANES)
    out_cols = xbar_pad + tail_pad

    # ---- the kernel ----------------------------------------------------------
    def kernel(x_ref, adj_ref, wc_ref, b0_ref, *rest):
        slab_refs = rest[:n_slabs]
        bias_ref = rest[n_slabs]
        out_ref = rest[n_slabs + 1]

        def W(name):                       # static, 128-aligned lane slice (view)
            si, off, w = wloc[name]
            return slab_refs[si][:, off:off + w]

        def B(name):
            off, w = bloc[name]
            return bias_ref[:, off:off + w]

        def mm(a, b):
            # bf16 operands at the MXU, f32 accumulate; elementwise stays f32.
            return jnp.dot(a.astype(bf16), b.astype(bf16),
                           preferred_element_type=f32)

        relu = lambda t: jnp.maximum(t, 0.0)

        # ---- AE.conv0 : Conv1d(V->1, k=3, pad=1) as one lane-dense matmul ----
        pro_x = mm(x_ref[...], wc_ref[...]) + b0_ref[0]               # (N, L)

        # ---- fused enc_1 | gnn_1 matmul (both consume pro_x) -----------------
        hg = mm(pro_x, W("eg1"))                                      # (N, 2*n_enc1)
        h1 = relu(hg[:, :n_enc1] + B("e1"))
        g1_support = hg[:, n_enc1:]                                   # pro_x @ g1_w

        # ---- AE encoder -------------------------------------------------------
        h2 = relu(mm(h1, W("e2")) + B("e2"))
        h3 = relu(mm(h2, W("e3")) + B("e3"))
        # TODO(synk): nn.Dropout(0.5) on enc_h3 applied as identity (eval mode).
        z = mm(h3, W("z")) + B("z")

        # ---- AE decoder -------------------------------------------------------
        dh1 = relu(mm(z, W("d1")) + B("d1"))
        dh2 = relu(mm(dh1, W("d2")) + B("d2"))
        dh3 = relu(mm(dh2, W("d3")) + B("d3"))
        xbar = relu(mm(dh3, W("xb")) + B("xb"))
        # TODO(synk): second nn.Dropout(0.5) applied as identity (eval mode).

        # ---- AE.conv1 : Conv1d(1->V, k=3, pad=1) as one lane-dense matmul ----
        xbar_flat = mm(xbar, W("wd")) + B("b1")                       # (N, V*L)

        # ---- GCN branch -------------------------------------------------------
        adj_m = adj_ref[...]

        def gnn(a, wname, active=True):
            out = mm(adj_m, mm(a, W(wname)))
            return relu(out) if active else out

        h = relu(mm(adj_m, g1_support))                               # gnn_1
        h = gnn((1.0 - SIGMA) * h + SIGMA * h1, "g2")
        h = gnn((1.0 - SIGMA) * h + SIGMA * h2, "g3")
        h = gnn((1.0 - SIGMA) * h + SIGMA * h3, "g4", active=False)
        # TODO(synk): SDCN nn.Dropout(0.5) applied as identity (eval mode).
        logits = mm((1.0 - SIGMA) * h + SIGMA * z, W("fc")) + B("fc")

        # softmax over dim=1; divide on the (otherwise idle) EUP slot.
        mx = jnp.max(logits, axis=1, keepdims=True)
        e = jnp.exp(logits - mx)
        pred = e * pl.reciprocal(jnp.sum(e, axis=1, keepdims=True), approx=True)

        # ---- packed, lane-dense epilogue: two unmasked 128-aligned stores ----
        n_rows = pred.shape[0]
        fill = tail_pad - tail_w
        tail_parts = [pred, z, pro_x]
        if fill:
            tail_parts.append(jnp.zeros((n_rows, fill), f32))
        tail = jnp.concatenate(tail_parts, axis=1)                    # (N, tail_pad)

        xb_fill = xbar_pad - (V * L)
        if xb_fill:
            xbar_flat = jnp.concatenate(
                [xbar_flat, jnp.zeros((n_rows, xb_fill), f32)], axis=1)
        out_ref[:, :xbar_pad] = xbar_flat
        out_ref[:, xbar_pad:] = tail

    vmem = lambda: pl.BlockSpec(memory_space=pltpu.MemorySpace.VMEM)
    smem = lambda: pl.BlockSpec(memory_space=pltpu.MemorySpace.SMEM)

    inputs = [x_flat, adj_b, wc, p["b0"], *slabs, bias_slab]
    in_specs = [vmem(), vmem(), vmem(), smem()] + [vmem()] * (n_slabs + 1)

    packed = pl.pallas_call(
        kernel,
        out_shape=jax.ShapeDtypeStruct((N, out_cols), f32),
        in_specs=in_specs,
        out_specs=vmem(),
        compiler_params=pltpu.CompilerParams(vmem_limit_bytes=32 * 1024 * 1024),
    )(*inputs)

    # ---- unpack (layout plumbing only) ---------------------------------------
    x_bar = packed[:, :V * L].reshape(N, V, L)
    c = xbar_pad
    predict = packed[:, c:c + n_clusters]
    z_out = packed[:, c + n_clusters:c + n_clusters + n_z]
    pro_x = packed[:, c + n_clusters + n_z:c + n_clusters + n_z + L]
    return x_bar, predict, z_out, pro_x


# ----------------------------------------------------------------------------
# Deterministic parameter init (shapes from the module's __init__)
# ----------------------------------------------------------------------------
def init_params(key, V, L, n_enc1, n_enc2, n_enc3, n_dec1, n_dec2, n_dec3,
                n_z, n_clusters):
    keys = iter(jax.random.split(key, 64))
    p = {}

    def unif(k, shape, scale):
        return jax.random.uniform(k, shape, jnp.float32, -scale, scale)

    # conv0: Conv1d(V -> 1, k=3) weight (1, V, 3), bias (1,)
    s0 = 1.0 / float(jnp.sqrt(V * 3.0))
    p["w0"] = unif(next(keys), (1, V, 3), s0)[0]            # (V, 3)
    p["b0"] = unif(next(keys), (1,), s0)                    # (1,)
    # conv1: Conv1d(1 -> V, k=3) weight (V, 1, 3), bias (V,)
    s1 = 1.0 / float(jnp.sqrt(1 * 3.0))
    p["w1"] = unif(next(keys), (V, 1, 3), s1)[:, 0, :]      # (V, 3)
    p["b1"] = unif(next(keys), (V,), s1)                    # (V,)

    def lin(name, fi, fo):
        s = 1.0 / float(jnp.sqrt(fi))
        p[name + "_w"] = unif(next(keys), (fi, fo), s)      # stored as (in, out)
        p[name + "_b"] = unif(next(keys), (1, fo), s)

    lin("e1", L, n_enc1)
    lin("e2", n_enc1, n_enc2)
    lin("e3", n_enc2, n_enc3)
    lin("z", n_enc3, n_z)
    lin("d1", n_z, n_dec1)
    lin("d2", n_dec1, n_dec2)
    lin("d3", n_dec2, n_dec3)
    lin("xb", n_dec3, L)

    def gnn_w(fi, fo):  # xavier-uniform
        lim = float(jnp.sqrt(6.0 / (fi + fo)))
        return unif(next(keys), (fi, fo), lim)

    p["g1_w"] = gnn_w(L, n_enc1)
    p["g2_w"] = gnn_w(n_enc1, n_enc2)
    p["g3_w"] = gnn_w(n_enc2, n_enc3)
    p["g4_w"] = gnn_w(n_enc3, n_z)

    lin("fc", n_z, n_clusters)
    return p


# ----------------------------------------------------------------------------
# Pure-JAX reference (f32, HIGHEST precision; independent of the packing)
# ----------------------------------------------------------------------------
def reference_forward(x, adj, p):
    mm = lambda a, b: jnp.dot(a, b, precision=jax.lax.Precision.HIGHEST)
    relu = lambda a: jnp.maximum(a, 0.0)
    lin = lambda a, w, b: mm(a, w) + b

    N, V, L = x.shape
    # conv0
    xp = jnp.pad(x, ((0, 0), (0, 0), (1, 1)))
    pro_x = jnp.zeros((N, L), jnp.float32)
    for v in range(V):
        for k in range(3):
            pro_x = pro_x + xp[:, v, k:k + L] * p["w0"][v, k]
    pro_x = pro_x + p["b0"][0]

    h1 = relu(lin(pro_x, p["e1_w"], p["e1_b"]))
    h2 = relu(lin(h1, p["e2_w"], p["e2_b"]))
    h3 = relu(lin(h2, p["e3_w"], p["e3_b"]))
    z = lin(h3, p["z_w"], p["z_b"])
    dh1 = relu(lin(z, p["d1_w"], p["d1_b"]))
    dh2 = relu(lin(dh1, p["d2_w"], p["d2_b"]))
    dh3 = relu(lin(dh2, p["d3_w"], p["d3_b"]))
    xbar = relu(lin(dh3, p["xb_w"], p["xb_b"]))

    xbp = jnp.pad(xbar, ((0, 0), (1, 1)))
    chans = []
    for c in range(V):
        ch = jnp.full((N, L), p["b1"][c], jnp.float32)
        for k in range(3):
            ch = ch + xbp[:, k:k + L] * p["w1"][c, k]
        chans.append(ch)
    x_bar = jnp.stack(chans, axis=1)   # (N, V, L)

    def gnn(a, w, active=True):
        out = mm(adj, mm(a, w))
        return relu(out) if active else out

    h = gnn(pro_x, p["g1_w"])
    h = gnn((1 - SIGMA) * h + SIGMA * h1, p["g2_w"])
    h = gnn((1 - SIGMA) * h + SIGMA * h2, p["g3_w"])
    h = gnn((1 - SIGMA) * h + SIGMA * h3, p["g4_w"], active=False)
    logits = lin((1 - SIGMA) * h + SIGMA * z, p["fc_w"], p["fc_b"])
    predict = jax.nn.softmax(logits, axis=1)
    return x_bar, predict, z, pro_x


# ----------------------------------------------------------------------------
if __name__ == "__main__":
    # TODO(synk): benchmark/tune at realistic node counts (hundreds-thousands);
    # at N=16 the kernel is launch/DMA latency bound by construction.
    N = 16           # number of nodes / samples
    V = 4            # variable_num (conv channels)
    L = 32           # n_input
    n_enc1, n_enc2, n_enc3 = 64, 32, 64
    n_dec1, n_dec2, n_dec3 = 64, 32, 64
    n_z = 16
    n_clusters = 8

    root = jax.random.PRNGKey(0)
    k_x, k_adj, k_p = jax.random.split(root, 3)

    x = jax.random.normal(k_x, (N, V, L), jnp.float32)
    adj_raw = jax.random.uniform(k_adj, (N, N), jnp.float32, 0.0, 1.0)
    adj = adj_raw / jnp.sum(adj_raw, axis=1, keepdims=True)   # row-normalized adjacency

    params = init_params(k_p, V, L, n_enc1, n_enc2, n_enc3,
                         n_dec1, n_dec2, n_dec3, n_z, n_clusters)

    fwd = jax.jit(sdcn_forward)
    outs = fwd(x, adj, params)
    outs = jax.block_until_ready(outs)

    refs = reference_forward(x, adj, params)
    names = ["x_bar", "predict", "z", "pro_x"]
    for name, o, r in zip(names, outs, refs):
        assert o.shape == r.shape, (name, o.shape, r.shape)
        assert bool(jnp.all(jnp.isfinite(o))), name
        # bf16-at-the-MXU (same effective precision as default MXU precision)
        # plus EUP approx reciprocal -> tolerance 2e-2.
        assert bool(jnp.allclose(o, r, atol=2e-2, rtol=2e-2)), (
            name, float(jnp.max(jnp.abs(o - r))))

    print("KERNEL_OK")
</pallas_src>

<mosaic_0001>
module attributes {stable_mosaic.version = 11 : i64} {
  func.func @kernel(%arg0: memref<16x128xbf16, #tpu.memory_space<vmem>>, %arg1: memref<16x16xbf16, #tpu.memory_space<vmem>>, %arg2: memref<128x32xbf16, #tpu.memory_space<vmem>>, %arg3: memref<1xf32, #tpu.memory_space<smem>>, %arg4: memref<16x256xbf16, #tpu.memory_space<vmem>>, %arg5: memref<32x640xbf16, #tpu.memory_space<vmem>>, %arg6: memref<64x768xbf16, #tpu.memory_space<vmem>>, %arg7: memref<1x1280xf32, #tpu.memory_space<vmem>>, %arg8: memref<16x256xf32, #tpu.memory_space<vmem>>) attributes {dimension_semantics = [], scalar_prefetch = 0 : i64, scratch_operands = 0 : i64, tpu.core_type = #tpu.core_type<tc>} {
    %c0 = arith.constant 0 : index
    %c0_0 = arith.constant 0 : index
    %0 = vector.load %arg0[%c0, %c0_0] : memref<16x128xbf16, #tpu.memory_space<vmem>>, vector<16x128xbf16>
    %c0_1 = arith.constant 0 : index
    %c0_2 = arith.constant 0 : index
    %1 = vector.load %arg2[%c0_1, %c0_2] : memref<128x32xbf16, #tpu.memory_space<vmem>>, vector<128x32xbf16>
    %cst = arith.constant dense<0.000000e+00> : vector<16x32xf32>
    %2 = tpu.matmul %0, %1, %cst {dimension_numbers = #tpu.dot_dimension_numbers<[1], [0], [0], [1], [0, 0, 1, 1], [], []>} : vector<16x128xbf16>, vector<128x32xbf16>, vector<16x32xf32> -> vector<16x32xf32>
    %c0_3 = arith.constant 0 : index
    %3 = memref.load %arg3[%c0_3] : memref<1xf32, #tpu.memory_space<smem>>
    %4 = vector.broadcast %3 : f32 to vector<16x32xf32>
    %5 = arith.addf %2, %4 : vector<16x32xf32>
    %c0_4 = arith.constant 0 : index
    %c0_5 = arith.constant 0 : index
    %6 = vector.load %arg5[%c0_4, %c0_5] : memref<32x640xbf16, #tpu.memory_space<vmem>>, vector<32x128xbf16>
    %7 = arith.truncf %5 : vector<16x32xf32> to vector<16x32xbf16>
    %cst_6 = arith.constant dense<0.000000e+00> : vector<16x128xf32>
    %8 = tpu.matmul %7, %6, %cst_6 {dimension_numbers = #tpu.dot_dimension_numbers<[1], [0], [0], [1], [0, 0, 1, 1], [], []>} : vector<16x32xbf16>, vector<32x128xbf16>, vector<16x128xf32> -> vector<16x128xf32>
    %9 = vector.extract_strided_slice %8 {offsets = [0, 0], sizes = [16, 64], strides = [1, 1]} : vector<16x128xf32> to vector<16x64xf32>
    %c0_7 = arith.constant 0 : index
    %c0_8 = arith.constant 0 : index
    %10 = vector.load %arg7[%c0_7, %c0_8] : memref<1x1280xf32, #tpu.memory_space<vmem>>, vector<1x64xf32>
    %11 = vector.broadcast %10 : vector<1x64xf32> to vector<16x64xf32>
    %12 = arith.addf %9, %11 : vector<16x64xf32>
    %cst_9 = arith.constant 0.000000e+00 : f32
    %13 = vector.broadcast %cst_9 : f32 to vector<16x64xf32>
    %14 = arith.maximumf %12, %13 : vector<16x64xf32>
    %15 = vector.extract_strided_slice %8 {offsets = [0, 64], sizes = [16, 64], strides = [1, 1]} : vector<16x128xf32> to vector<16x64xf32>
    %c0_10 = arith.constant 0 : index
    %c0_11 = arith.constant 0 : index
    %16 = vector.load %arg6[%c0_10, %c0_11] : memref<64x768xbf16, #tpu.memory_space<vmem>>, vector<64x32xbf16>
    %17 = arith.truncf %14 : vector<16x64xf32> to vector<16x64xbf16>
    %cst_12 = arith.constant dense<0.000000e+00> : vector<16x32xf32>
    %18 = tpu.matmul %17, %16, %cst_12 {dimension_numbers = #tpu.dot_dimension_numbers<[1], [0], [0], [1], [0, 0, 1, 1], [], []>} : vector<16x64xbf16>, vector<64x32xbf16>, vector<16x32xf32> -> vector<16x32xf32>
    %c0_13 = arith.constant 0 : index
    %c128 = arith.constant 128 : index
    %19 = vector.load %arg7[%c0_13, %c128] : memref<1x1280xf32, #tpu.memory_space<vmem>>, vector<1x32xf32>
    %20 = vector.broadcast %19 : vector<1x32xf32> to vector<16x32xf32>
    %21 = arith.addf %18, %20 : vector<16x32xf32>
    %cst_14 = arith.constant 0.000000e+00 : f32
    %22 = vector.broadcast %cst_14 : f32 to vector<16x32xf32>
    %23 = arith.maximumf %21, %22 : vector<16x32xf32>
    %c0_15 = arith.constant 0 : index
    %c128_16 = arith.constant 128 : index
    %24 = vector.load %arg5[%c0_15, %c128_16] : memref<32x640xbf16, #tpu.memory_space<vmem>>, vector<32x64xbf16>
    %25 = arith.truncf %23 : vector<16x32xf32> to vector<16x32xbf16>
    %cst_17 = arith.constant dense<0.000000e+00> : vector<16x64xf32>
    %26 = tpu.matmul %25, %24, %cst_17 {dimension_numbers = #tpu.dot_dimension_numbers<[1], [0], [0], [1], [0, 0, 1, 1], [], []>} : vector<16x32xbf16>, vector<32x64xbf16>, vector<16x64xf32> -> vector<16x64xf32>
    %c0_18 = arith.constant 0 : index
    %c256 = arith.constant 256 : index
    %27 = vector.load %arg7[%c0_18, %c256] : memref<1x1280xf32, #tpu.memory_space<vmem>>, vector<1x64xf32>
    %28 = vector.broadcast %27 : vector<1x64xf32> to vector<16x64xf32>
    %29 = arith.addf %26, %28 : vector<16x64xf32>
    %cst_19 = arith.constant 0.000000e+00 : f32
    %30 = vector.broadcast %cst_19 : f32 to vector<16x64xf32>
    %31 = arith.maximumf %29, %30 : vector<16x64xf32>
    %c0_20 = arith.constant 0 : index
    %c128_21 = arith.constant 128 : index
    %32 = vector.load %arg6[%c0_20, %c128_21] : memref<64x768xbf16, #tpu.memory_space<vmem>>, vector<64x16xbf16>
    %33 = arith.truncf %31 : vector<16x64xf32> to vector<16x64xbf16>
    %cst_22 = arith.constant dense<0.000000e+00> : vector<16x16xf32>
    %34 = tpu.matmul %33, %32, %cst_22 {dimension_numbers = #tpu.dot_dimension_numbers<[1], [0], [0], [1], [0, 0, 1, 1], [], []>} : vector<16x64xbf16>, vector<64x16xbf16>, vector<16x16xf32> -> vector<16x16xf32>
    %c0_23 = arith.constant 0 : index
    %c384 = arith.constant 384 : index
    %35 = vector.load %arg7[%c0_23, %c384] : memref<1x1280xf32, #tpu.memory_space<vmem>>, vector<1x16xf32>
    %36 = vector.broadcast %35 : vector<1x16xf32> to vector<16x16xf32>
    %37 = arith.addf %34, %36 : vector<16x16xf32>
    %c0_24 = arith.constant 0 : index
    %c0_25 = arith.constant 0 : index
    %38 = vector.load %arg4[%c0_24, %c0_25] : memref<16x256xbf16, #tpu.memory_space<vmem>>, vector<16x64xbf16>
    %39 = arith.truncf %37 : vector<16x16xf32> to vector<16x16xbf16>
    %cst_26 = arith.constant dense<0.000000e+00> : vector<16x64xf32>
    %40 = tpu.matmul %39, %38, %cst_26 {dimension_numbers = #tpu.dot_dimension_numbers<[1], [0], [0], [1], [0, 0, 1, 1], [], []>} : vector<16x16xbf16>, vector<16x64xbf16>, vector<16x64xf32> -> vector<16x64xf32>
    %c0_27 = arith.constant 0 : index
    %c512 = arith.constant 512 : index
    %41 = vector.load %arg7[%c0_27, %c512] : memref<1x1280xf32, #tpu.memory_space<vmem>>, vector<1x64xf32>
    %42 = vector.broadcast %41 : vector<1x64xf32> to vector<16x64xf32>
    %43 = arith.addf %40, %42 : vector<16x64xf32>
    %cst_28 = arith.constant 0.000000e+00 : f32
    %44 = vector.broadcast %cst_28 : f32 to vector<16x64xf32>
    %45 = arith.maximumf %43, %44 : vector<16x64xf32>
    %c0_29 = arith.constant 0 : index
    %c256_30 = arith.constant 256 : index
    %46 = vector.load %arg6[%c0_29, %c256_30] : memref<64x768xbf16, #tpu.memory_space<vmem>>, vector<64x32xbf16>
    %47 = arith.truncf %45 : vector<16x64xf32> to vector<16x64xbf16>
    %cst_31 = arith.constant dense<0.000000e+00> : vector<16x32xf32>
    %48 = tpu.matmul %47, %46, %cst_31 {dimension_numbers = #tpu.dot_dimension_numbers<[1], [0], [0], [1], [0, 0, 1, 1], [], []>} : vector<16x64xbf16>, vector<64x32xbf16>, vector<16x32xf32> -> vector<16x32xf32>
    %c0_32 = arith.constant 0 : index
    %c640 = arith.constant 640 : index
    %49 = vector.load %arg7[%c0_32, %c640] : memref<1x1280xf32, #tpu.memory_space<vmem>>, vector<1x32xf32>
    %50 = vector.broadcast %49 : vector<1x32xf32> to vector<16x32xf32>
    %51 = arith.addf %48, %50 : vector<16x32xf32>
    %cst_33 = arith.constant 0.000000e+00 : f32
    %52 = vector.broadcast %cst_33 : f32 to vector<16x32xf32>
    %53 = arith.maximumf %51, %52 : vector<16x32xf32>
    %c0_34 = arith.constant 0 : index
    %c256_35 = arith.constant 256 : index
    %54 = vector.load %arg5[%c0_34, %c256_35] : memref<32x640xbf16, #tpu.memory_space<vmem>>, vector<32x64xbf16>
    %55 = arith.truncf %53 : vector<16x32xf32> to vector<16x32xbf16>
    %cst_36 = arith.constant dense<0.000000e+00> : vector<16x64xf32>
    %56 = tpu.matmul %55, %54, %cst_36 {dimension_numbers = #tpu.dot_dimension_numbers<[1], [0], [0], [1], [0, 0, 1, 1], [], []>} : vector<16x32xbf16>, vector<32x64xbf16>, vector<16x64xf32> -> vector<16x64xf32>
    %c0_37 = arith.constant 0 : index
    %c768 = arith.constant 768 : index
    %57 = vector.load %arg7[%c0_37, %c768] : memref<1x1280xf32, #tpu.memory_space<vmem>>, vector<1x64xf32>
    %58 = vector.broadcast %57 : vector<1x64xf32> to vector<16x64xf32>
    %59 = arith.addf %56, %58 : vector<16x64xf32>
    %cst_38 = arith.constant 0.000000e+00 : f32
    %60 = vector.broadcast %cst_38 : f32 to vector<16x64xf32>
    %61 = arith.maximumf %59, %60 : vector<16x64xf32>
    %c0_39 = arith.constant 0 : index
    %c384_40 = arith.constant 384 : index
    %62 = vector.load %arg6[%c0_39, %c384_40] : memref<64x768xbf16, #tpu.memory_space<vmem>>, vector<64x32xbf16>
    %63 = arith.truncf %61 : vector<16x64xf32> to vector<16x64xbf16>
    %cst_41 = arith.constant dense<0.000000e+00> : vector<16x32xf32>
    %64 = tpu.matmul %63, %62, %cst_41 {dimension_numbers = #tpu.dot_dimension_numbers<[1], [0], [0], [1], [0, 0, 1, 1], [], []>} : vector<16x64xbf16>, vector<64x32xbf16>, vector<16x32xf32> -> vector<16x32xf32>
    %c0_42 = arith.constant 0 : index
    %c896 = arith.constant 896 : index
    %65 = vector.load %arg7[%c0_42, %c896] : memref<1x1280xf32, #tpu.memory_space<vmem>>, vector<1x32xf32>
    %66 = vector.broadcast %65 : vector<1x32xf32> to vector<16x32xf32>
    %67 = arith.addf %64, %66 : vector<16x32xf32>
    %cst_43 = arith.constant 0.000000e+00 : f32
    %68 = vector.broadcast %cst_43 : f32 to vector<16x32xf32>
    %69 = arith.maximumf %67, %68 : vector<16x32xf32>
    %c0_44 = arith.constant 0 : index
    %c512_45 = arith.constant 512 : index
    %70 = vector.load %arg5[%c0_44, %c512_45] : memref<32x640xbf16, #tpu.memory_space<vmem>>, vector<32x128xbf16>
    %71 = arith.truncf %69 : vector<16x32xf32> to vector<16x32xbf16>
    %cst_46 = arith.constant dense<0.000000e+00> : vector<16x128xf32>
    %72 = tpu.matmul %71, %70, %cst_46 {dimension_numbers = #tpu.dot_dimension_numbers<[1], [0], [0], [1], [0, 0, 1, 1], [], []>} : vector<16x32xbf16>, vector<32x128xbf16>, vector<16x128xf32> -> vector<16x128xf32>
    %c0_47 = arith.constant 0 : index
    %c1152 = arith.constant 1152 : index
    %73 = vector.load %arg7[%c0_47, %c1152] : memref<1x1280xf32, #tpu.memory_space<vmem>>, vector<1x128xf32>
    %74 = vector.broadcast %73 : vector<1x128xf32> to vector<16x128xf32>
    %75 = arith.addf %72, %74 : vector<16x128xf32>
    %c0_48 = arith.constant 0 : index
    %c0_49 = arith.constant 0 : index
    %76 = vector.load %arg1[%c0_48, %c0_49] : memref<16x16xbf16, #tpu.memory_space<vmem>>, vector<16x16xbf16>
    %77 = arith.truncf %15 : vector<16x64xf32> to vector<16x64xbf16>
    %cst_50 = arith.constant dense<0.000000e+00> : vector<16x64xf32>
    %78 = tpu.matmul %76, %77, %cst_50 {dimension_numbers = #tpu.dot_dimension_numbers<[1], [0], [0], [1], [0, 0, 1, 1], [], []>} : vector<16x16xbf16>, vector<16x64xbf16>, vector<16x64xf32> -> vector<16x64xf32>
    %cst_51 = arith.constant 0.000000e+00 : f32
    %79 = vector.broadcast %cst_51 : f32 to vector<16x64xf32>
    %80 = arith.maximumf %78, %79 : vector<16x64xf32>
    %cst_52 = arith.constant 0.699999988 : f32
    %81 = vector.broadcast %cst_52 : f32 to vector<16x64xf32>
    %82 = arith.mulf %81, %80 : vector<16x64xf32>
    %cst_53 = arith.constant 3.000000e-01 : f32
    %83 = vector.broadcast %cst_53 : f32 to vector<16x64xf32>
    %84 = arith.mulf %83, %14 : vector<16x64xf32>
    %85 = arith.addf %82, %84 : vector<16x64xf32>
    %c0_54 = arith.constant 0 : index
    %c512_55 = arith.constant 512 : index
    %86 = vector.load %arg6[%c0_54, %c512_55] : memref<64x768xbf16, #tpu.memory_space<vmem>>, vector<64x32xbf16>
    %87 = arith.truncf %85 : vector<16x64xf32> to vector<16x64xbf16>
    %cst_56 = arith.constant dense<0.000000e+00> : vector<16x32xf32>
    %88 = tpu.matmul %87, %86, %cst_56 {dimension_numbers = #tpu.dot_dimension_numbers<[1], [0], [0], [1], [0, 0, 1, 1], [], []>} : vector<16x64xbf16>, vector<64x32xbf16>, vector<16x32xf32> -> vector<16x32xf32>
    %89 = arith.truncf %88 : vector<16x32xf32> to vector<16x32xbf16>
    %cst_57 = arith.constant dense<0.000000e+00> : vector<16x32xf32>
    %90 = tpu.matmul %76, %89, %cst_57 {dimension_numbers = #tpu.dot_dimension_numbers<[1], [0], [0], [1], [0, 0, 1, 1], [], []>} : vector<16x16xbf16>, vector<16x32xbf16>, vector<16x32xf32> -> vector<16x32xf32>
    %cst_58 = arith.constant 0.000000e+00 : f32
    %91 = vector.broadcast %cst_58 : f32 to vector<16x32xf32>
    %92 = arith.maximumf %90, %91 : vector<16x32xf32>
    %cst_59 = arith.constant 0.699999988 : f32
    %93 = vector.broadcast %cst_59 : f32 to vector<16x32xf32>
    %94 = arith.mulf %93, %92 : vector<16x32xf32>
    %cst_60 = arith.constant 3.000000e-01 : f32
    %95 = vector.broadcast %cst_60 : f32 to vector<16x32xf32>
    %96 = arith.mulf %95, %23 : vector<16x32xf32>
    %97 = arith.addf %94, %96 : vector<16x32xf32>
    %c0_61 = arith.constant 0 : index
    %c384_62 = arith.constant 384 : index
    %98 = vector.load %arg5[%c0_61, %c384_62] : memref<32x640xbf16, #tpu.memory_space<vmem>>, vector<32x64xbf16>
    %99 = arith.truncf %97 : vector<16x32xf32> to vector<16x32xbf16>
    %cst_63 = arith.constant dense<0.000000e+00> : vector<16x64xf32>
    %100 = tpu.matmul %99, %98, %cst_63 {dimension_numbers = #tpu.dot_dimension_numbers<[1], [0], [0], [1], [0, 0, 1, 1], [], []>} : vector<16x32xbf16>, vector<32x64xbf16>, vector<16x64xf32> -> vector<16x64xf32>
    %101 = arith.truncf %100 : vector<16x64xf32> to vector<16x64xbf16>
    %cst_64 = arith.constant dense<0.000000e+00> : vector<16x64xf32>
    %102 = tpu.matmul %76, %101, %cst_64 {dimension_numbers = #tpu.dot_dimension_numbers<[1], [0], [0], [1], [0, 0, 1, 1], [], []>} : vector<16x16xbf16>, vector<16x64xbf16>, vector<16x64xf32> -> vector<16x64xf32>
    %cst_65 = arith.constant 0.000000e+00 : f32
    %103 = vector.broadcast %cst_65 : f32 to vector<16x64xf32>
    %104 = arith.maximumf %102, %103 : vector<16x64xf32>
    %cst_66 = arith.constant 0.699999988 : f32
    %105 = vector.broadcast %cst_66 : f32 to vector<16x64xf32>
    %106 = arith.mulf %105, %104 : vector<16x64xf32>
    %cst_67 = arith.constant 3.000000e-01 : f32
    %107 = vector.broadcast %cst_67 : f32 to vector<16x64xf32>
    %108 = arith.mulf %107, %31 : vector<16x64xf32>
    %109 = arith.addf %106, %108 : vector<16x64xf32>
    %c0_68 = arith.constant 0 : index
    %c640_69 = arith.constant 640 : index
    %110 = vector.load %arg6[%c0_68, %c640_69] : memref<64x768xbf16, #tpu.memory_space<vmem>>, vector<64x16xbf16>
    %111 = arith.truncf %109 : vector<16x64xf32> to vector<16x64xbf16>
    %cst_70 = arith.constant dense<0.000000e+00> : vector<16x16xf32>
    %112 = tpu.matmul %111, %110, %cst_70 {dimension_numbers = #tpu.dot_dimension_numbers<[1], [0], [0], [1], [0, 0, 1, 1], [], []>} : vector<16x64xbf16>, vector<64x16xbf16>, vector<16x16xf32> -> vector<16x16xf32>
    %113 = arith.truncf %112 : vector<16x16xf32> to vector<16x16xbf16>
    %cst_71 = arith.constant dense<0.000000e+00> : vector<16x16xf32>
    %114 = tpu.matmul %76, %113, %cst_71 {dimension_numbers = #tpu.dot_dimension_numbers<[1], [0], [0], [1], [0, 0, 1, 1], [], []>} : vector<16x16xbf16>, vector<16x16xbf16>, vector<16x16xf32> -> vector<16x16xf32>
    %cst_72 = arith.constant 0.699999988 : f32
    %115 = vector.broadcast %cst_72 : f32 to vector<16x16xf32>
    %116 = arith.mulf %115, %114 : vector<16x16xf32>
    %cst_73 = arith.constant 3.000000e-01 : f32
    %117 = vector.broadcast %cst_73 : f32 to vector<16x16xf32>
    %118 = arith.mulf %117, %37 : vector<16x16xf32>
    %119 = arith.addf %116, %118 : vector<16x16xf32>
    %c0_74 = arith.constant 0 : index
    %c128_75 = arith.constant 128 : index
    %120 = vector.load %arg4[%c0_74, %c128_75] : memref<16x256xbf16, #tpu.memory_space<vmem>>, vector<16x8xbf16>
    %121 = arith.truncf %119 : vector<16x16xf32> to vector<16x16xbf16>
    %cst_76 = arith.constant dense<0.000000e+00> : vector<16x8xf32>
    %122 = tpu.matmul %121, %120, %cst_76 {dimension_numbers = #tpu.dot_dimension_numbers<[1], [0], [0], [1], [0, 0, 1, 1], [], []>} : vector<16x16xbf16>, vector<16x8xbf16>, vector<16x8xf32> -> vector<16x8xf32>
    %c0_77 = arith.constant 0 : index
    %c1024 = arith.constant 1024 : index
    %123 = vector.load %arg7[%c0_77, %c1024] : memref<1x1280xf32, #tpu.memory_space<vmem>>, vector<1x8xf32>
    %124 = vector.broadcast %123 : vector<1x8xf32> to vector<16x8xf32>
    %125 = arith.addf %122, %124 : vector<16x8xf32>
    %cst_78 = arith.constant dense<0xFF800000> : vector<16xf32>
    %126 = vector.multi_reduction <maximumf>, %125, %cst_78 [1] : vector<16x8xf32> to vector<16xf32>
    %127 = vector.shape_cast %126 : vector<16xf32> to vector<16x1xf32>
    %128 = vector.broadcast %127 : vector<16x1xf32> to vector<16x8xf32>
    %129 = arith.subf %125, %128 : vector<16x8xf32>
    %130 = math.exp %129 : vector<16x8xf32>
    %cst_79 = arith.constant dense<0.000000e+00> : vector<16xf32>
    %131 = vector.multi_reduction <add>, %130, %cst_79 [1] : vector<16x8xf32> to vector<16xf32>
    %132 = vector.shape_cast %131 : vector<16xf32> to vector<16x1xf32>
    %133 = tpu.reciprocal %132 {approx = true} : vector<16x1xf32> -> vector<16x1xf32>
    %134 = vector.broadcast %133 : vector<16x1xf32> to vector<16x8xf32>
    %135 = arith.mulf %130, %134 : vector<16x8xf32>
    %cst_80 = arith.constant 0.000000e+00 : f32
    %136 = vector.broadcast %cst_80 : f32 to vector<16x72xf32>
    %137 = tpu.concatenate %135, %37, %5, %136 in 1 : vector<16x8xf32>, vector<16x16xf32>, vector<16x32xf32>, vector<16x72xf32> -> vector<16x128xf32>
    %c0_81 = arith.constant 0 : index
    %c0_82 = arith.constant 0 : index
    %138 = vector.load %arg8[%c0_81, %c0_82] : memref<16x256xf32, #tpu.memory_space<vmem>>, vector<16x128xf32>
    tpu.vector_store %arg8[%c0_81, %c0_82], %75 {strides = array<i32>} : memref<16x256xf32, #tpu.memory_space<vmem>>, vector<16x128xf32>,
    %c0_83 = arith.constant 0 : index
    %c128_84 = arith.constant 128 : index
    %139 = vector.load %arg8[%c0_83, %c128_84] : memref<16x256xf32, #tpu.memory_space<vmem>>, vector<16x128xf32>
    tpu.vector_store %arg8[%c0_83, %c128_84], %137 {strides = array<i32>} : memref<16x256xf32, #tpu.memory_space<vmem>>, vector<16x128xf32>,
    return
  }
}

</mosaic_0001>

<llo_original>
// kernel: sdcn_forward.1
$region0: #{sdcn_forward.1}
  #allocation0 [shape = 'u32[]', space=smem, size = 0x4, offset = 0x4, fixed_abs, tag = 'smem constant byte address 0x4 - core index']
  #allocation1 [shape = 'u32[144,128]{1,0:T(1,128)}', space=vmem, size = 0x12000, scoped, tag = 'internal scratch']
  #allocation2 [shape = 'f32[1]{0:T(128)S(6)}', space=smem, size = 0x200, scoped, tag = 'scoped memory for sdcn_forward.1']
  %s0 = inlined_call_operand.vmem [shape: bf16[16,128], index: 0, kind: input, shape index: {}]
  %s1 = inlined_call_operand.vmem [shape: bf16[16,16], index: 1, kind: input, shape index: {}]
  %s2 = inlined_call_operand.vmem [shape: bf16[128,32], index: 2, kind: input, shape index: {}]
  %s3 = inlined_call_operand.<no memory space> [shape: f32[1], index: 3, kind: input, shape index: {}]
  %s4 = inlined_call_operand.vmem [shape: bf16[16,256], index: 4, kind: input, shape index: {}]
  %s5 = inlined_call_operand.vmem [shape: bf16[32,640], index: 5, kind: input, shape index: {}]
  %s6 = inlined_call_operand.vmem [shape: bf16[64,768], index: 6, kind: input, shape index: {}]
  %s7 = inlined_call_operand.vmem [shape: f32[1,1280], index: 7, kind: input, shape index: {}]
  %s8 = inlined_call_operand.vmem [shape: f32[16,256], index: 8, kind: output, shape index: {}]
  %s9 = sld [smem:[#allocation0]]
  $region42: #{sdcn_forward.1} parent=0
    _
  %s11 = ssub.s32 1, %s9
  %s12 = scalar_select 0, %s11, %s9
  %13 = sst [smem:[#allocation2]] %s3
  // Predicated region
  $region2: #{sdcn_forward.1} parent=0 // pred_check
    _
  $region3: #{sdcn_forward.1} parent=0 // pred_check_branch
    %15 = sbr.rel (0) target = $region5
  $region4: #{sdcn_forward.1} parent=0 // pred_region
    _
  $region5: #{sdcn_forward.1} parent=0 // pred_fallthru
    _
  // Predicated region
  $region6: #{sdcn_forward.1} parent=0 // pred_check
    _
  $region7: #{sdcn_forward.1} parent=0 // pred_check_branch
    %17 = sbr.rel (0) target = $region9
  $region8: #{sdcn_forward.1} parent=0 // pred_region
    _
  $region9: #{sdcn_forward.1} parent=0 // pred_fallthru
    _
  // Predicated region
  $region10: #{sdcn_forward.1} parent=0 // pred_check
    _
  $region11: #{sdcn_forward.1} parent=0 // pred_check_branch
    %19 = sbr.rel (0) target = $region13
  $region12: #{sdcn_forward.1} parent=0 // pred_region
    _
  $region13: #{sdcn_forward.1} parent=0 // pred_fallthru
    _
  // Predicated region
  $region14: #{sdcn_forward.1} parent=0 // pred_check
    _
  $region15: #{sdcn_forward.1} parent=0 // pred_check_branch
    %21 = sbr.rel (0) target = $region17
  $region16: #{sdcn_forward.1} parent=0 // pred_region
    _
  $region17: #{sdcn_forward.1} parent=0 // pred_fallthru
    _
  // Predicated region
  $region18: #{sdcn_forward.1} parent=0 // pred_check
    _
  $region19: #{sdcn_forward.1} parent=0 // pred_check_branch
    %23 = sbr.rel (0) target = $region21
  $region20: #{sdcn_forward.1} parent=0 // pred_region
    _
  $region21: #{sdcn_forward.1} parent=0 // pred_fallthru
    _
  // Predicated region
  $region22: #{sdcn_forward.1} parent=0 // pred_check
    _
  $region23: #{sdcn_forward.1} parent=0 // pred_check_branch
    %25 = sbr.rel (0) target = $region25
  $region24: #{sdcn_forward.1} parent=0 // pred_region
    _
  $region25: #{sdcn_forward.1} parent=0 // pred_fallthru
    _
  // Predicated region
  $region26: #{sdcn_forward.1} parent=0 // pred_check
    _
  $region27: #{sdcn_forward.1} parent=0 // pred_check_branch
    %27 = sbr.rel (0) target = $region29
  $region28: #{sdcn_forward.1} parent=0 // pred_region
    _
  $region29: #{sdcn_forward.1} parent=0 // pred_fallthru
    _
  // Predicated region
  $region30: #{sdcn_forward.1} parent=0 // pred_check
    _
  $region31: #{sdcn_forward.1} parent=0 // pred_check_branch
    %29 = sbr.rel (0) target = $region33
  $region32: #{sdcn_forward.1} parent=0 // pred_region
    _
  $region33: #{sdcn_forward.1} parent=0 // pred_fallthru
    _
  %v31 = vld [vmem:[%s0] sm:$0xf]
  %v32 = vld [vmem:[%s0 + $0x4] sm:$0xf]
  %v33 = vld [vmem:[%s2] sm:$0xf]
  %v34 = vld [vmem:[%s2 + $0x4] sm:$0xf]
  %v35 = vld [vmem:[%s2 + $0x8] sm:$0xf]
  %v36 = vld [vmem:[%s2 + $0xc] sm:$0xf]
  %v37 = vld [vmem:[%s2 + $0x10] sm:$0xf]
  %v38 = vld [vmem:[%s2 + $0x14] sm:$0xf]
  %v39 = vld [vmem:[%s2 + $0x18] sm:$0xf]
  %v40 = vld [vmem:[%s2 + $0x1c] sm:$0xf]
  %v41 = vld [vmem:[%s2 + $0x20] sm:$0xf]
  %v42 = vld [vmem:[%s2 + $0x24] sm:$0xf]
  %v43 = vld [vmem:[%s2 + $0x28] sm:$0xf]
  %v44 = vld [vmem:[%s2 + $0x2c] sm:$0xf]
  %v45 = vld [vmem:[%s2 + $0x30] sm:$0xf]
  %v46 = vld [vmem:[%s2 + $0x34] sm:$0xf]
  %v47 = vld [vmem:[%s2 + $0x38] sm:$0xf]
  %v48 = vld [vmem:[%s2 + $0x3c] sm:$0xf]
  %s49 = sld [smem:[#allocation2]]
  %v50 = vstv %s49
  %v53 = vunpack.c.l.b16 %v31
  %v54 = vunpack.c.l.b16 %v32
  %v55 = vpack.c.b16 %v54, %v53
  %v73 = vunpack.c.l.b16 %v33
  %v74 = vunpack.c.l.b16 %v34
  %v75 = vunpack.c.l.b16 %v35
  %v76 = vunpack.c.l.b16 %v36
  %v77 = vunpack.c.l.b16 %v37
  %v78 = vunpack.c.l.b16 %v38
  %v79 = vunpack.c.l.b16 %v39
  %v80 = vunpack.c.l.b16 %v40
  %v81 = vunpack.c.l.b16 %v41
  %v82 = vunpack.c.l.b16 %v42
  %v83 = vunpack.c.l.b16 %v43
  %v84 = vunpack.c.l.b16 %v44
  %v85 = vunpack.c.l.b16 %v45
  %v86 = vunpack.c.l.b16 %v46
  %v87 = vunpack.c.l.b16 %v47
  %v88 = vunpack.c.l.b16 %v48
  %v89 = vpack.c.b16 %v74, %v73
  %v90 = vpack.c.b16 %v76, %v75
  %v91 = vpack.c.b16 %v78, %v77
  %v92 = vpack.c.b16 %v80, %v79
  %v93 = vpack.c.b16 %v82, %v81
  %v94 = vpack.c.b16 %v84, %v83
  %v95 = vpack.c.b16 %v86, %v85
  %v96 = vpack.c.b16 %v88, %v87
  %105 = vmatprep.subr.bf16.mxu0 0
  %106 = vmatpush1.bf16.msra.mxu0 %v89
  %107 = vmatprep.subr.bf16.mxu0 0
  %108 = vmatpush1.bf16.msra.mxu0 %v90
  %109 = vmatprep.subr.bf16.mxu0 0
  %110 = vmatpush1.bf16.msra.mxu0 %v91
  %111 = vmatprep.subr.bf16.mxu0 0
  %112 = vmatpush1.bf16.msra.mxu0 %v92
  %113 = vmatprep.subr.bf16.mxu0 0
  %114 = vmatpush1.bf16.msra.mxu0 %v93
  %115 = vmatprep.subr.bf16.mxu0 0
  %116 = vmatpush1.bf16.msra.mxu0 %v94
  %117 = vmatprep.subr.bf16.mxu0 0
  %118 = vmatpush1.bf16.msra.mxu0 %v95
  %119 = vmatprep.subr.bf16.mxu0 0
  %120 = vmatpush1.bf16.msra.mxu0 %v96
  %121 = vmatprep.subr.bf16.mxu0 0
  %122 = vmatpush1.bf16.msra.mxu0 0
  %123 = vmatprep.subr.bf16.mxu0 0
  %124 = vmatpush1.bf16.msra.mxu0 0
  %125 = vmatprep.subr.bf16.mxu0 0
  %126 = vmatpush1.bf16.msra.mxu0 0
  %127 = vmatprep.subr.bf16.mxu0 0
  %128 = vmatpush1.bf16.msra.mxu0 0
  %129 = vmatprep.subr.bf16.mxu0 0
  %130 = vmatpush1.bf16.msra.mxu0 0
  %131 = vmatprep.subr.bf16.mxu0 0
  %132 = vmatpush1.bf16.msra.mxu0 0
  %133 = vmatprep.subr.bf16.mxu0 0
  %134 = vmatpush1.bf16.msra.mxu0 0
  %135 = vmatprep.subr.bf16.mxu0 0
  %136 = vmatpush1.bf16.msra.mxu0 0
  %137 = vmatprep.mubr.bf16.mxu0 0
  %138 = vmatmul.mubr.bf16.gmra.mrb[0].mxu0 %v55
  %v139 = vpop.f32.mrb[0].mxu0
  %v140 = vadd.f32 %v50, %v139
  %v141 = vpop.f32.mrb[0].mxu0
  %v142 = vpop.f32.mrb[0].mxu0
  %v143 = vadd.f32 %v50, %v142
  %v144 = vpop.f32.mrb[0].mxu0
  %145 = vdwg.mxu0
  %v146 = vld [vmem:[%s5] sm:$0xf]
  %v147 = vld [vmem:[%s5 + $0x14] sm:$0xf]
  %v148 = vld [vmem:[%s5 + $0x28] sm:$0xf]
  %v149 = vld [vmem:[%s5 + $0x3c] sm:$0xf]
  %v150 = vpack.c.bf16 %v143, %v140
  %v155 = vunpack.c.l.b16 %v146
  %v156 = vunpack.c.l.b16 %v147
  %v157 = vunpack.c.l.b16 %v148
  %v158 = vunpack.c.l.b16 %v149
  %v159 = vpack.c.b16 %v156, %v155
  %v160 = vpack.c.b16 %v158, %v157
  %vm163 = vcmask 261120
  %v165 = vsel %vm163, %v150, 0
  %167 = vmatprep.subr.bf16.mxu0 0
  %168 = vmatpush1.bf16.msra.mxu0 %v159
  %169 = vmatprep.subr.bf16.mxu0 0
  %170 = vmatpush1.bf16.msra.mxu0 %v160
  %171 = vmatprep.subr.bf16.mxu0 0
  %172 = vmatpush1.bf16.msra.mxu0 0
  %173 = vmatprep.subr.bf16.mxu0 0
  %174 = vmatpush1.bf16.msra.mxu0 0
  %175 = vmatprep.subr.bf16.mxu0 0
  %176 = vmatpush1.bf16.msra.mxu0 0
  %177 = vmatprep.subr.bf16.mxu0 0
  %178 = vmatpush1.bf16.msra.mxu0 0
  %179 = vmatprep.subr.bf16.mxu0 0
  %180 = vmatpush1.bf16.msra.mxu0 0
  %181 = vmatprep.subr.bf16.mxu0 0
  %182 = vmatpush1.bf16.msra.mxu0 0
  %183 = vmatprep.subr.bf16.mxu0 0
  %184 = vmatpush1.bf16.msra.mxu0 0
  %185 = vmatprep.subr.bf16.mxu0 0
  %186 = vmatpush1.bf16.msra.mxu0 0
  %187 = vmatprep.subr.bf16.mxu0 0
  %188 = vmatpush1.bf16.msra.mxu0 0
  %189 = vmatprep.subr.bf16.mxu0 0
  %190 = vmatpush1.bf16.msra.mxu0 0
  %191 = vmatprep.subr.bf16.mxu0 0
  %192 = vmatpush1.bf16.msra.mxu0 0
  %193 = vmatprep.subr.bf16.mxu0 0
  %194 = vmatpush1.bf16.msra.mxu0 0
  %195 = vmatprep.subr.bf16.mxu0 0
  %196 = vmatpush1.bf16.msra.mxu0 0
  %197 = vmatprep.subr.bf16.mxu0 0
  %198 = vmatpush1.bf16.msra.mxu0 0
  %199 = vmatprep.mubr.bf16.mxu0 0
  %200 = vmatmul.mubr.bf16.gmra.mrb[0].mxu0 %v165
  %v201 = vpop.f32.mrb[0].mxu0
  %v202 = vadd.f32 0.0, %v201
  %v203 = vpop.f32.mrb[0].mxu0
  %v204 = vpop.f32.mrb[0].mxu0
  %v205 = vadd.f32 0.0, %v204
  %v206 = vpop.f32.mrb[0].mxu0
  %207 = vdwg.mxu0
  %v208 = vld [vmem:[%s7] sm:$0x1]
  %v210 = vlaneseq
  %v211 = vshrl.u32 %v210, 7
  %v212 = vsub.s32 0, %v211
  %v213 = vrot.slane %v208, %v212
  %v215 = vadd.f32 %v202, %v213
  %v216 = vadd.f32 %v205, %v213
  %v217 = vmax.f32 %v215, 0.0
  %v218 = vmax.f32 %v216, 0.0
  %v219 = vld [vmem:[%s6] sm:$0xf]
  %v220 = vld [vmem:[%s6 + $0x18] sm:$0xf]
  %v221 = vld [vmem:[%s6 + $0x30] sm:$0xf]
  %v222 = vld [vmem:[%s6 + $0x48] sm:$0xf]
  %v223 = vld [vmem:[%s6 + $0x60] sm:$0xf]
  %v224 = vld [vmem:[%s6 + $0x78] sm:$0xf]
  %v225 = vld [vmem:[%s6 + $0x90] sm:$0xf]
  %v226 = vld [vmem:[%s6 + $0xa8] sm:$0xf]
  %v227 = vpack.c.bf16 %v218, %v217
  %v228 = vld [vmem:[%s7 + $0x1] sm:$0x1]
  %v230 = vlaneseq
  %v231 = vshrl.u32 %v230, 7
  %v232 = vsub.s32 0, %v231
  %v233 = vrot.slane %v228, %v232
  %v243 = vunpack.c.l.b16 %v219
  %v244 = vunpack.c.l.b16 %v220
  %v245 = vunpack.c.l.b16 %v221
  %v246 = vunpack.c.l.b16 %v222
  %v247 = vunpack.c.l.b16 %v223
  %v248 = vunpack.c.l.b16 %v224
  %v249 = vunpack.c.l.b16 %v225
  %v250 = vunpack.c.l.b16 %v226
  %v251 = vpack.c.b16 %v244, %v243
  %v252 = vpack.c.b16 %v246, %v245
  %v253 = vpack.c.b16 %v248, %v247
  %v254 = vpack.c.b16 %v250, %v249
  %vm259 = vcmask 523264
  %v261 = vsel %vm259, %v227, 0
  %263 = vmatprep.subr.bf16.mxu0 0
  %264 = vmatpush1.bf16.msra.mxu0 %v251
  %265 = vmatprep.subr.bf16.mxu0 0
  %266 = vmatpush1.bf16.msra.mxu0 %v252
  %267 = vmatprep.subr.bf16.mxu0 0
  %268 = vmatpush1.bf16.msra.mxu0 %v253
  %269 = vmatprep.subr.bf16.mxu0 0
  %270 = vmatpush1.bf16.msra.mxu0 %v254
  %271 = vmatprep.subr.bf16.mxu0 0
  %272 = vmatpush1.bf16.msra.mxu0 0
  %273 = vmatprep.subr.bf16.mxu0 0
  %274 = vmatpush1.bf16.msra.mxu0 0
  %275 = vmatprep.subr.bf16.mxu0 0
  %276 = vmatpush1.bf16.msra.mxu0 0
  %277 = vmatprep.subr.bf16.mxu0 0
  %278 = vmatpush1.bf16.msra.mxu0 0
  %279 = vmatprep.subr.bf16.mxu0 0
  %280 = vmatpush1.bf16.msra.mxu0 0
  %281 = vmatprep.subr.bf16.mxu0 0
  %282 = vmatpush1.bf16.msra.mxu0 0
  %283 = vmatprep.subr.bf16.mxu0 0
  %284 = vmatpush1.bf16.msra.mxu0 0
  %285 = vmatprep.subr.bf16.mxu0 0
  %286 = vmatpush1.bf16.msra.mxu0 0
  %287 = vmatprep.subr.bf16.mxu0 0
  %288 = vmatpush1.bf16.msra.mxu0 0
  %289 = vmatprep.subr.bf16.mxu0 0
  %290 = vmatpush1.bf16.msra.mxu0 0
  %291 = vmatprep.subr.bf16.mxu0 0
  %292 = vmatpush1.bf16.msra.mxu0 0
  %293 = vmatprep.subr.bf16.mxu0 0
  %294 = vmatpush1.bf16.msra.mxu0 0
  %295 = vmatprep.mubr.bf16.mxu0 0
  %296 = vmatmul.mubr.bf16.gmra.mrb[0].mxu0 %v261
  %v297 = vpop.f32.mrb[0].mxu0
  %v298 = vadd.f32 %v233, %v297
  %v299 = vpop.f32.mrb[0].mxu0
  %v300 = vpop.f32.mrb[0].mxu0
  %v301 = vadd.f32 %v233, %v300
  %v302 = vpop.f32.mrb[0].mxu0
  %303 = vdwg.mxu0
  %v304 = vmax.f32 %v298, 0.0
  %v305 = vmax.f32 %v301, 0.0
  %v306 = vld [vmem:[%s5 + $0x4] sm:$0xf]
  %v307 = vld [vmem:[%s5 + $0x18] sm:$0xf]
  %v308 = vld [vmem:[%s5 + $0x2c] sm:$0xf]
  %v309 = vld [vmem:[%s5 + $0x40] sm:$0xf]
  %v310 = vpack.c.bf16 %v305, %v304
  %v311 = vld [vmem:[%s7 + $0x2] sm:$0x1]
  %v313 = vlaneseq
  %v314 = vshrl.u32 %v313, 7
  %v315 = vsub.s32 0, %v314
  %v316 = vrot.slane %v311, %v315
  %v322 = vunpack.c.l.b16 %v306
  %v323 = vunpack.c.l.b16 %v307
  %v324 = vunpack.c.l.b16 %v308
  %v325 = vunpack.c.l.b16 %v309
  %v326 = vpack.c.b16 %v323, %v322
  %v327 = vpack.c.b16 %v325, %v324
  %v331 = vsel %vm163, %v310, 0
  %333 = vmatprep.subr.bf16.mxu0 0
  %334 = vmatpush1.bf16.msra.mxu0 %v326
  %335 = vmatprep.subr.bf16.mxu0 0
  %336 = vmatpush1.bf16.msra.mxu0 %v327
  %337 = vmatprep.subr.bf16.mxu0 0
  %338 = vmatpush1.bf16.msra.mxu0 0
  %339 = vmatprep.subr.bf16.mxu0 0
  %340 = vmatpush1.bf16.msra.mxu0 0
  %341 = vmatprep.subr.bf16.mxu0 0
  %342 = vmatpush1.bf16.msra.mxu0 0
  %343 = vmatprep.subr.bf16.mxu0 0
  %344 = vmatpush1.bf16.msra.mxu0 0
  %345 = vmatprep.subr.bf16.mxu0 0
  %346 = vmatpush1.bf16.msra.mxu0 0
  %347 = vmatprep.subr.bf16.mxu0 0
  %348 = vmatpush1.bf16.msra.mxu0 0
  %349 = vmatprep.subr.bf16.mxu0 0
  %350 = vmatpush1.bf16.msra.mxu0 0
  %351 = vmatprep.subr.bf16.mxu0 0
  %352 = vmatpush1.bf16.msra.mxu0 0
  %353 = vmatprep.subr.bf16.mxu0 0
  %354 = vmatpush1.bf16.msra.mxu0 0
  %355 = vmatprep.subr.bf16.mxu0 0
  %356 = vmatpush1.bf16.msra.mxu0 0
  %357 = vmatprep.subr.bf16.mxu0 0
  %358 = vmatpush1.bf16.msra.mxu0 0
  %359 = vmatprep.subr.bf16.mxu0 0
  %360 = vmatpush1.bf16.msra.mxu0 0
  %361 = vmatprep.subr.bf16.mxu0 0
  %362 = vmatpush1.bf16.msra.mxu0 0
  %363 = vmatprep.subr.bf16.mxu0 0
  %364 = vmatpush1.bf16.msra.mxu0 0
  %365 = vmatprep.mubr.bf16.mxu0 0
  %366 = vmatmul.mubr.bf16.gmra.mrb[0].mxu0 %v331
  %v367 = vpop.f32.mrb[0].mxu0
  %v368 = vadd.f32 %v316, %v367
  %v369 = vpop.f32.mrb[0].mxu0
  %v370 = vpop.f32.mrb[0].mxu0
  %v371 = vadd.f32 %v316, %v370
  %v372 = vpop.f32.mrb[0].mxu0
  %373 = vdwg.mxu0
  %v374 = vmax.f32 %v368, 0.0
  %v375 = vmax.f32 %v371, 0.0
  %v376 = vld [vmem:[%s6 + $0x4] sm:$0xf]
  %v377 = vld [vmem:[%s6 + $0x1c] sm:$0xf]
  %v378 = vld [vmem:[%s6 + $0x34] sm:$0xf]
  %v379 = vld [vmem:[%s6 + $0x4c] sm:$0xf]
  %v380 = vld [vmem:[%s6 + $0x64] sm:$0xf]
  %v381 = vld [vmem:[%s6 + $0x7c] sm:$0xf]
  %v382 = vld [vmem:[%s6 + $0x94] sm:$0xf]
  %v383 = vld [vmem:[%s6 + $0xac] sm:$0xf]
  %v384 = vpack.c.bf16 %v375, %v374
  %v385 = vld [vmem:[%s7 + $0x3] sm:$0x1]
  %v387 = vlaneseq
  %v388 = vshrl.u32 %v387, 7
  %v389 = vsub.s32 0, %v388
  %v390 = vrot.slane %v385, %v389
  %v400 = vunpack.c.l.b16 %v376
  %v401 = vunpack.c.l.b16 %v377
  %v402 = vunpack.c.l.b16 %v378
  %v403 = vunpack.c.l.b16 %v379
  %v404 = vunpack.c.l.b16 %v380
  %v405 = vunpack.c.l.b16 %v381
  %v406 = vunpack.c.l.b16 %v382
  %v407 = vunpack.c.l.b16 %v383
  %v408 = vpack.c.b16 %v401, %v400
  %v409 = vpack.c.b16 %v403, %v402
  %v410 = vpack.c.b16 %v405, %v404
  %v411 = vpack.c.b16 %v407, %v406
  %v417 = vsel %vm259, %v384, 0
  %419 = vmatprep.subr.bf16.mxu0 0
  %420 = vmatpush1.bf16.msra.mxu0 %v408
  %421 = vmatprep.subr.bf16.mxu0 0
  %422 = vmatpush1.bf16.msra.mxu0 %v409
  %423 = vmatprep.subr.bf16.mxu0 0
  %424 = vmatpush1.bf16.msra.mxu0 %v410
  %425 = vmatprep.subr.bf16.mxu0 0
  %426 = vmatpush1.bf16.msra.mxu0 %v411
  %427 = vmatprep.subr.bf16.mxu0 0
  %428 = vmatpush1.bf16.msra.mxu0 0
  %429 = vmatprep.subr.bf16.mxu0 0
  %430 = vmatpush1.bf16.msra.mxu0 0
  %431 = vmatprep.subr.bf16.mxu0 0
  %432 = vmatpush1.bf16.msra.mxu0 0
  %433 = vmatprep.subr.bf16.mxu0 0
  %434 = vmatpush1.bf16.msra.mxu0 0
  %435 = vmatprep.subr.bf16.mxu0 0
  %436 = vmatpush1.bf16.msra.mxu0 0
  %437 = vmatprep.subr.bf16.mxu0 0
  %438 = vmatpush1.bf16.msra.mxu0 0
  %439 = vmatprep.subr.bf16.mxu0 0
  %440 = vmatpush1.bf16.msra.mxu0 0
  %441 = vmatprep.subr.bf16.mxu0 0
  %442 = vmatpush1.bf16.msra.mxu0 0
  %443 = vmatprep.subr.bf16.mxu0 0
  %444 = vmatpush1.bf16.msra.mxu0 0
  %445 = vmatprep.subr.bf16.mxu0 0
  %446 = vmatpush1.bf16.msra.mxu0 0
  %447 = vmatprep.subr.bf16.mxu0 0
  %448 = vmatpush1.bf16.msra.mxu0 0
  %449 = vmatprep.subr.bf16.mxu0 0
  %450 = vmatpush1.bf16.msra.mxu0 0
  %451 = vmatprep.mubr.bf16.mxu0 0
  %452 = vmatmul.mubr.bf16.gmra.mrb[0].mxu0 %v417
  %v453 = vpop.f32.mrb[0].mxu0
  %v454 = vadd.f32 %v390, %v453
  %v455 = vpop.f32.mrb[0].mxu0
  %v456 = vpop.f32.mrb[0].mxu0
  %v457 = vadd.f32 %v390, %v456
  %v458 = vpop.f32.mrb[0].mxu0
  %459 = vdwg.mxu0
  %v460 = vld [vmem:[%s4] sm:$0xf]
  %v461 = vld [vmem:[%s4 + $0x8] sm:$0xf]
  %v462 = vpack.c.bf16 %v457, %v454
  %v463 = vld [vmem:[%s7 + $0x4] sm:$0x1]
  %v465 = vlaneseq
  %v466 = vshrl.u32 %v465, 7
  %v467 = vsub.s32 0, %v466
  %v468 = vrot.slane %v463, %v467
  %v472 = vunpack.c.l.b16 %v460
  %v473 = vunpack.c.l.b16 %v461
  %v474 = vpack.c.b16 %v473, %v472
  %vm476 = vcmask 130048
  %v478 = vsel %vm476, %v462, 0
  %480 = vmatprep.subr.bf16.mxu0 0
  %481 = vmatpush1.bf16.msra.mxu0 %v474
  %482 = vmatprep.subr.bf16.mxu0 0
  %483 = vmatpush1.bf16.msra.mxu0 0
  %484 = vmatprep.subr.bf16.mxu0 0
  %485 = vmatpush1.bf16.msra.mxu0 0
  %486 = vmatprep.subr.bf16.mxu0 0
  %487 = vmatpush1.bf16.msra.mxu0 0
  %488 = vmatprep.subr.bf16.mxu0 0
  %489 = vmatpush1.bf16.msra.mxu0 0
  %490 = vmatprep.subr.bf16.mxu0 0
  %491 = vmatpush1.bf16.msra.mxu0 0
  %492 = vmatprep.subr.bf16.mxu0 0
  %493 = vmatpush1.bf16.msra.mxu0 0
  %494 = vmatprep.subr.bf16.mxu0 0
  %495 = vmatpush1.bf16.msra.mxu0 0
  %496 = vmatprep.subr.bf16.mxu0 0
  %497 = vmatpush1.bf16.msra.mxu0 0
  %498 = vmatprep.subr.bf16.mxu0 0
  %499 = vmatpush1.bf16.msra.mxu0 0
  %500 = vmatprep.subr.bf16.mxu0 0
  %501 = vmatpush1.bf16.msra.mxu0 0
  %502 = vmatprep.subr.bf16.mxu0 0
  %503 = vmatpush1.bf16.msra.mxu0 0
  %504 = vmatprep.subr.bf16.mxu0 0
  %505 = vmatpush1.bf16.msra.mxu0 0
  %506 = vmatprep.subr.bf16.mxu0 0
  %507 = vmatpush1.bf16.msra.mxu0 0
  %508 = vmatprep.subr.bf16.mxu0 0
  %509 = vmatpush1.bf16.msra.mxu0 0
  %510 = vmatprep.subr.bf16.mxu0 0
  %511 = vmatpush1.bf16.msra.mxu0 0
  %512 = vmatprep.mubr.bf16.mxu0 0
  %513 = vmatmul.mubr.bf16.gmra.mrb[0].mxu0 %v478
  %v514 = vpop.f32.mrb[0].mxu0
  %v515 = vadd.f32 %v468, %v514
  %v516 = vpop.f32.mrb[0].mxu0
  %v517 = vpop.f32.mrb[0].mxu0
  %v518 = vadd.f32 %v468, %v517
  %v519 = vpop.f32.mrb[0].mxu0
  %520 = vdwg.mxu0
  %v521 = vmax.f32 %v515, 0.0
  %v522 = vmax.f32 %v518, 0.0
  %v523 = vld [vmem:[%s6 + $0x8] sm:$0xf]
  %v524 = vld [vmem:[%s6 + $0x20] sm:$0xf]
  %v525 = vld [vmem:[%s6 + $0x38] sm:$0xf]
  %v526 = vld [vmem:[%s6 + $0x50] sm:$0xf]
  %v527 = vld [vmem:[%s6 + $0x68] sm:$0xf]
  %v528 = vld [vmem:[%s6 + $0x80] sm:$0xf]
  %v529 = vld [vmem:[%s6 + $0x98] sm:$0xf]
  %v530 = vld [vmem:[%s6 + $0xb0] sm:$0xf]
  %v531 = vpack.c.bf16 %v522, %v521
  %v532 = vld [vmem:[%s7 + $0x5] sm:$0x1]
  %v534 = vlaneseq
  %v535 = vshrl.u32 %v534, 7
  %v536 = vsub.s32 0, %v535
  %v537 = vrot.slane %v532, %v536
  %v547 = vunpack.c.l.b16 %v523
  %v548 = vunpack.c.l.b16 %v524
  %v549 = vunpack.c.l.b16 %v525
  %v550 = vunpack.c.l.b16 %v526
  %v551 = vunpack.c.l.b16 %v527
  %v552 = vunpack.c.l.b16 %v528
  %v553 = vunpack.c.l.b16 %v529
  %v554 = vunpack.c.l.b16 %v530
  %v555 = vpack.c.b16 %v548, %v547
  %v556 = vpack.c.b16 %v550, %v549
  %v557 = vpack.c.b16 %v552, %v551
  %v558 = vpack.c.b16 %v554, %v553
  %v564 = vsel %vm259, %v531, 0
  %566 = vmatprep.subr.bf16.mxu0 0
  %567 = vmatpush1.bf16.msra.mxu0 %v555
  %568 = vmatprep.subr.bf16.mxu0 0
  %569 = vmatpush1.bf16.msra.mxu0 %v556
  %570 = vmatprep.subr.bf16.mxu0 0
  %571 = vmatpush1.bf16.msra.mxu0 %v557
  %572 = vmatprep.subr.bf16.mxu0 0
  %573 = vmatpush1.bf16.msra.mxu0 %v558
  %574 = vmatprep.subr.bf16.mxu0 0
  %575 = vmatpush1.bf16.msra.mxu0 0
  %576 = vmatprep.subr.bf16.mxu0 0
  %577 = vmatpush1.bf16.msra.mxu0 0
  %578 = vmatprep.subr.bf16.mxu0 0
  %579 = vmatpush1.bf16.msra.mxu0 0
  %580 = vmatprep.subr.bf16.mxu0 0
  %581 = vmatpush1.bf16.msra.mxu0 0
  %582 = vmatprep.subr.bf16.mxu0 0
  %583 = vmatpush1.bf16.msra.mxu0 0
  %584 = vmatprep.subr.bf16.mxu0 0
  %585 = vmatpush1.bf16.msra.mxu0 0
  %586 = vmatprep.subr.bf16.mxu0 0
  %587 = vmatpush1.bf16.msra.mxu0 0
  %588 = vmatprep.subr.bf16.mxu0 0
  %589 = vmatpush1.bf16.msra.mxu0 0
  %590 = vmatprep.subr.bf16.mxu0 0
  %591 = vmatpush1.bf16.msra.mxu0 0
  %592 = vmatprep.subr.bf16.mxu0 0
  %593 = vmatpush1.bf16.msra.mxu0 0
  %594 = vmatprep.subr.bf16.mxu0 0
  %595 = vmatpush1.bf16.msra.mxu0 0
  %596 = vmatprep.subr.bf16.mxu0 0
  %597 = vmatpush1.bf16.msra.mxu0 0
  %598 = vmatprep.mubr.bf16.mxu0 0
  %599 = vmatmul.mubr.bf16.gmra.mrb[0].mxu0 %v564
  %v600 = vpop.f32.mrb[0].mxu0
  %v601 = vadd.f32 %v537, %v600
  %v602 = vpop.f32.mrb[0].mxu0
  %v603 = vpop.f32.mrb[0].mxu0
  %v604 = vadd.f32 %v537, %v603
  %v605 = vpop.f32.mrb[0].mxu0
  %606 = vdwg.mxu0
  %v607 = vmax.f32 %v601, 0.0
  %v608 = vmax.f32 %v604, 0.0
  %v609 = vld [vmem:[%s5 + $0x8] sm:$0xf]
  %v610 = vld [vmem:[%s5 + $0x1c] sm:$0xf]
  %v611 = vld [vmem:[%s5 + $0x30] sm:$0xf]
  %v612 = vld [vmem:[%s5 + $0x44] sm:$0xf]
  %v613 = vpack.c.bf16 %v608, %v607
  %v614 = vld [vmem:[%s7 + $0x6] sm:$0x1]
  %v616 = vlaneseq
  %v617 = vshrl.u32 %v616, 7
  %v618 = vsub.s32 0, %v617
  %v619 = vrot.slane %v614, %v618
  %v625 = vunpack.c.l.b16 %v609
  %v626 = vunpack.c.l.b16 %v610
  %v627 = vunpack.c.l.b16 %v611
  %v628 = vunpack.c.l.b16 %v612
  %v629 = vpack.c.b16 %v626, %v625
  %v630 = vpack.c.b16 %v628, %v627
  %v634 = vsel %vm163, %v613, 0
  %636 = vmatprep.subr.bf16.mxu0 0
  %637 = vmatpush1.bf16.msra.mxu0 %v629
  %638 = vmatprep.subr.bf16.mxu0 0
  %639 = vmatpush1.bf16.msra.mxu0 %v630
  %640 = vmatprep.subr.bf16.mxu0 0
  %641 = vmatpush1.bf16.msra.mxu0 0
  %642 = vmatprep.subr.bf16.mxu0 0
  %643 = vmatpush1.bf16.msra.mxu0 0
  %644 = vmatprep.subr.bf16.mxu0 0
  %645 = vmatpush1.bf16.msra.mxu0 0
  %646 = vmatprep.subr.bf16.mxu0 0
  %647 = vmatpush1.bf16.msra.mxu0 0
  %648 = vmatprep.subr.bf16.mxu0 0
  %649 = vmatpush1.bf16.msra.mxu0 0
  %650 = vmatprep.subr.bf16.mxu0 0
  %651 = vmatpush1.bf16.msra.mxu0 0
  %652 = vmatprep.subr.bf16.mxu0 0
  %653 = vmatpush1.bf16.msra.mxu0 0
  %654 = vmatprep.subr.bf16.mxu0 0
  %655 = vmatpush1.bf16.msra.mxu0 0
  %656 = vmatprep.subr.bf16.mxu0 0
  %657 = vmatpush1.bf16.msra.mxu0 0
  %658 = vmatprep.subr.bf16.mxu0 0
  %659 = vmatpush1.bf16.msra.mxu0 0
  %660 = vmatprep.subr.bf16.mxu0 0
  %661 = vmatpush1.bf16.msra.mxu0 0
  %662 = vmatprep.subr.bf16.mxu0 0
  %663 = vmatpush1.bf16.msra.mxu0 0
  %664 = vmatprep.subr.bf16.mxu0 0
  %665 = vmatpush1.bf16.msra.mxu0 0
  %666 = vmatprep.subr.bf16.mxu0 0
  %667 = vmatpush1.bf16.msra.mxu0 0
  %668 = vmatprep.mubr.bf16.mxu0 0
  %669 = vmatmul.mubr.bf16.gmra.mrb[0].mxu0 %v634
  %v670 = vpop.f32.mrb[0].mxu0
  %v671 = vadd.f32 %v619, %v670
  %v672 = vpop.f32.mrb[0].mxu0
  %v673 = vpop.f32.mrb[0].mxu0
  %v674 = vadd.f32 %v619, %v673
  %v675 = vpop.f32.mrb[0].mxu0
  %676 = vdwg.mxu0
  %v677 = vmax.f32 %v671, 0.0
  %v678 = vmax.f32 %v674, 0.0
  %v679 = vld [vmem:[%s6 + $0xc] sm:$0xf]
  %v680 = vld [vmem:[%s6 + $0x24] sm:$0xf]
  %v681 = vld [vmem:[%s6 + $0x3c] sm:$0xf]
  %v682 = vld [vmem:[%s6 + $0x54] sm:$0xf]
  %v683 = vld [vmem:[%s6 + $0x6c] sm:$0xf]
  %v684 = vld [vmem:[%s6 + $0x84] sm:$0xf]
  %v685 = vld [vmem:[%s6 + $0x9c] sm:$0xf]
  %v686 = vld [vmem:[%s6 + $0xb4] sm:$0xf]
  %v687 = vpack.c.bf16 %v678, %v677
  %v688 = vld [vmem:[%s7 + $0x7] sm:$0x1]
  %v690 = vlaneseq
  %v691 = vshrl.u32 %v690, 7
  %v692 = vsub.s32 0, %v691
  %v693 = vrot.slane %v688, %v692
  %v703 = vunpack.c.l.b16 %v679
  %v704 = vunpack.c.l.b16 %v680
  %v705 = vunpack.c.l.b16 %v681
  %v706 = vunpack.c.l.b16 %v682
  %v707 = vunpack.c.l.b16 %v683
  %v708 = vunpack.c.l.b16 %v684
  %v709 = vunpack.c.l.b16 %v685
  %v710 = vunpack.c.l.b16 %v686
  %v711 = vpack.c.b16 %v704, %v703
  %v712 = vpack.c.b16 %v706, %v705
  %v713 = vpack.c.b16 %v708, %v707
  %v714 = vpack.c.b16 %v710, %v709
  %v720 = vsel %vm259, %v687, 0
  %722 = vmatprep.subr.bf16.mxu0 0
  %723 = vmatpush1.bf16.msra.mxu0 %v711
  %724 = vmatprep.subr.bf16.mxu0 0
  %725 = vmatpush1.bf16.msra.mxu0 %v712
  %726 = vmatprep.subr.bf16.mxu0 0
  %727 = vmatpush1.bf16.msra.mxu0 %v713
  %728 = vmatprep.subr.bf16.mxu0 0
  %729 = vmatpush1.bf16.msra.mxu0 %v714
  %730 = vmatprep.subr.bf16.mxu0 0
  %731 = vmatpush1.bf16.msra.mxu0 0
  %732 = vmatprep.subr.bf16.mxu0 0
  %733 = vmatpush1.bf16.msra.mxu0 0
  %734 = vmatprep.subr.bf16.mxu0 0
  %735 = vmatpush1.bf16.msra.mxu0 0
  %736 = vmatprep.subr.bf16.mxu0 0
  %737 = vmatpush1.bf16.msra.mxu0 0
  %738 = vmatprep.subr.bf16.mxu0 0
  %739 = vmatpush1.bf16.msra.mxu0 0
  %740 = vmatprep.subr.bf16.mxu0 0
  %741 = vmatpush1.bf16.msra.mxu0 0
  %742 = vmatprep.subr.bf16.mxu0 0
  %743 = vmatpush1.bf16.msra.mxu0 0
  %744 = vmatprep.subr.bf16.mxu0 0
  %745 = vmatpush1.bf16.msra.mxu0 0
  %746 = vmatprep.subr.bf16.mxu0 0
  %747 = vmatpush1.bf16.msra.mxu0 0
  %748 = vmatprep.subr.bf16.mxu0 0
  %749 = vmatpush1.bf16.msra.mxu0 0
  %750 = vmatprep.subr.bf16.mxu0 0
  %751 = vmatpush1.bf16.msra.mxu0 0
  %752 = vmatprep.subr.bf16.mxu0 0
  %753 = vmatpush1.bf16.msra.mxu0 0
  %754 = vmatprep.mubr.bf16.mxu0 0
  %755 = vmatmul.mubr.bf16.gmra.mrb[0].mxu0 %v720
  %v756 = vpop.f32.mrb[0].mxu0
  %v757 = vadd.f32 %v693, %v756
  %v758 = vpop.f32.mrb[0].mxu0
  %v759 = vpop.f32.mrb[0].mxu0
  %v760 = vadd.f32 %v693, %v759
  %v761 = vpop.f32.mrb[0].mxu0
  %762 = vdwg.mxu0
  %v763 = vmax.f32 %v757, 0.0
  %v764 = vmax.f32 %v760, 0.0
  %v765 = vld [vmem:[%s5 + $0x10] sm:$0xf]
  %v766 = vld [vmem:[%s5 + $0x24] sm:$0xf]
  %v767 = vld [vmem:[%s5 + $0x38] sm:$0xf]
  %v768 = vld [vmem:[%s5 + $0x4c] sm:$0xf]
  %v769 = vpack.c.bf16 %v764, %v763
  %v770 = vld [vmem:[%s7 + $0x9] sm:$0x1]
  %v772 = vlaneseq
  %v773 = vshrl.u32 %v772, 7
  %v774 = vsub.s32 0, %v773
  %v775 = vrot.slane %v770, %v774
  %v781 = vunpack.c.l.b16 %v765
  %v782 = vunpack.c.l.b16 %v766
  %v783 = vunpack.c.l.b16 %v767
  %v784 = vunpack.c.l.b16 %v768
  %v785 = vpack.c.b16 %v782, %v781
  %v786 = vpack.c.b16 %v784, %v783
  %v790 = vsel %vm163, %v769, 0
  %792 = vmatprep.subr.bf16.mxu0 0
  %793 = vmatpush1.bf16.msra.mxu0 %v785
  %794 = vmatprep.subr.bf16.mxu0 0
  %795 = vmatpush1.bf16.msra.mxu0 %v786
  %796 = vmatprep.subr.bf16.mxu0 0
  %797 = vmatpush1.bf16.msra.mxu0 0
  %798 = vmatprep.subr.bf16.mxu0 0
  %799 = vmatpush1.bf16.msra.mxu0 0
  %800 = vmatprep.subr.bf16.mxu0 0
  %801 = vmatpush1.bf16.msra.mxu0 0
  %802 = vmatprep.subr.bf16.mxu0 0
  %803 = vmatpush1.bf16.msra.mxu0 0
  %804 = vmatprep.subr.bf16.mxu0 0
  %805 = vmatpush1.bf16.msra.mxu0 0
  %806 = vmatprep.subr.bf16.mxu0 0
  %807 = vmatpush1.bf16.msra.mxu0 0
  %808 = vmatprep.subr.bf16.mxu0 0
  %809 = vmatpush1.bf16.msra.mxu0 0
  %810 = vmatprep.subr.bf16.mxu0 0
  %811 = vmatpush1.bf16.msra.mxu0 0
  %812 = vmatprep.subr.bf16.mxu0 0
  %813 = vmatpush1.bf16.msra.mxu0 0
  %814 = vmatprep.subr.bf16.mxu0 0
  %815 = vmatpush1.bf16.msra.mxu0 0
  %816 = vmatprep.subr.bf16.mxu0 0
  %817 = vmatpush1.bf16.msra.mxu0 0
  %818 = vmatprep.subr.bf16.mxu0 0
  %819 = vmatpush1.bf16.msra.mxu0 0
  %820 = vmatprep.subr.bf16.mxu0 0
  %821 = vmatpush1.bf16.msra.mxu0 0
  %822 = vmatprep.subr.bf16.mxu0 0
  %823 = vmatpush1.bf16.msra.mxu0 0
  %824 = vmatprep.mubr.bf16.mxu0 0
  %825 = vmatmul.mubr.bf16.gmra.mrb[0].mxu0 %v790
  %v826 = vpop.f32.mrb[0].mxu0
  %v827 = vadd.f32 %v775, %v826
  %v828 = vpop.f32.mrb[0].mxu0
  %v829 = vpop.f32.mrb[0].mxu0
  %v830 = vadd.f32 %v775, %v829
  %v831 = vpop.f32.mrb[0].mxu0
  %832 = vdwg.mxu0
  %v833 = vld [vmem:[%s1] sm:$0xf]
  %v834 = vld [vmem:[%s1 + $0x4] sm:$0xf]
  %v835 = vpack.c.bf16 %v205, %v202
  %v838 = vunpack.c.l.b16 %v833
  %v839 = vunpack.c.l.b16 %v834
  %v840 = vpack.c.b16 %v839, %v838
  %842 = vrot.lane.b32.xlu0 %v835, 64
  %v843 = vpop.permute.xlu0 %842
  %v846 = vsel %vm476, %v840, 0
  %848 = vmatprep.subr.bf16.mxu0 0
  %849 = vmatpush1.bf16.msra.mxu0 %v843
  %850 = vmatprep.subr.bf16.mxu0 0
  %851 = vmatpush1.bf16.msra.mxu0 0
  %852 = vmatprep.subr.bf16.mxu0 0
  %853 = vmatpush1.bf16.msra.mxu0 0
  %854 = vmatprep.subr.bf16.mxu0 0
  %855 = vmatpush1.bf16.msra.mxu0 0
  %856 = vmatprep.subr.bf16.mxu0 0
  %857 = vmatpush1.bf16.msra.mxu0 0
  %858 = vmatprep.subr.bf16.mxu0 0
  %859 = vmatpush1.bf16.msra.mxu0 0
  %860 = vmatprep.subr.bf16.mxu0 0
  %861 = vmatpush1.bf16.msra.mxu0 0
  %862 = vmatprep.subr.bf16.mxu0 0
  %863 = vmatpush1.bf16.msra.mxu0 0
  %864 = vmatprep.subr.bf16.mxu0 0
  %865 = vmatpush1.bf16.msra.mxu0 0
  %866 = vmatprep.subr.bf16.mxu0 0
  %867 = vmatpush1.bf16.msra.mxu0 0
  %868 = vmatprep.subr.bf16.mxu0 0
  %869 = vmatpush1.bf16.msra.mxu0 0
  %870 = vmatprep.subr.bf16.mxu0 0
  %871 = vmatpush1.bf16.msra.mxu0 0
  %872 = vmatprep.subr.bf16.mxu0 0
  %873 = vmatpush1.bf16.msra.mxu0 0
  %874 = vmatprep.subr.bf16.mxu0 0
  %875 = vmatpush1.bf16.msra.mxu0 0
  %876 = vmatprep.subr.bf16.mxu0 0
  %877 = vmatpush1.bf16.msra.mxu0 0
  %878 = vmatprep.subr.bf16.mxu0 0
  %879 = vmatpush1.bf16.msra.mxu0 0
  %880 = vmatprep.mubr.bf16.mxu0 0
  %881 = vmatmul.mubr.bf16.gmra.mrb[0].mxu0 %v846
  %v882 = vpop.f32.mrb[0].mxu0
  %v883 = vadd.f32 0.0, %v882
  %v884 = vpop.f32.mrb[0].mxu0
  %v885 = vpop.f32.mrb[0].mxu0
  %v886 = vadd.f32 0.0, %v885
  %v887 = vpop.f32.mrb[0].mxu0
  %888 = vdwg.mxu0
  %v889 = vmax.f32 %v883, 0.0
  %v890 = vmax.f32 %v886, 0.0
  %v891 = vmul.f32 %v889, 0.7
  %v892 = vmul.f32 %v890, 0.7
  %v893 = vmul.f32 %v217, 0.3
  %v894 = vmul.f32 %v218, 0.3
  %v895 = vadd.f32 %v891, %v893
  %v896 = vadd.f32 %v892, %v894
  %v897 = vld [vmem:[%s6 + $0x10] sm:$0xf]
  %v898 = vld [vmem:[%s6 + $0x28] sm:$0xf]
  %v899 = vld [vmem:[%s6 + $0x40] sm:$0xf]
  %v900 = vld [vmem:[%s6 + $0x58] sm:$0xf]
  %v901 = vld [vmem:[%s6 + $0x70] sm:$0xf]
  %v902 = vld [vmem:[%s6 + $0x88] sm:$0xf]
  %v903 = vld [vmem:[%s6 + $0xa0] sm:$0xf]
  %v904 = vld [vmem:[%s6 + $0xb8] sm:$0xf]
  %v905 = vpack.c.bf16 %v896, %v895
  %v914 = vunpack.c.l.b16 %v897
  %v915 = vunpack.c.l.b16 %v898
  %v916 = vunpack.c.l.b16 %v899
  %v917 = vunpack.c.l.b16 %v900
  %v918 = vunpack.c.l.b16 %v901
  %v919 = vunpack.c.l.b16 %v902
  %v920 = vunpack.c.l.b16 %v903
  %v921 = vunpack.c.l.b16 %v904
  %v922 = vpack.c.b16 %v915, %v914
  %v923 = vpack.c.b16 %v917, %v916
  %v924 = vpack.c.b16 %v919, %v918
  %v925 = vpack.c.b16 %v921, %v920
  %v931 = vsel %vm259, %v905, 0
  %933 = vmatprep.subr.bf16.mxu0 0
  %934 = vmatpush1.bf16.msra.mxu0 %v922
  %935 = vmatprep.subr.bf16.mxu0 0
  %936 = vmatpush1.bf16.msra.mxu0 %v923
  %937 = vmatprep.subr.bf16.mxu0 0
  %938 = vmatpush1.bf16.msra.mxu0 %v924
  %939 = vmatprep.subr.bf16.mxu0 0
  %940 = vmatpush1.bf16.msra.mxu0 %v925
  %941 = vmatprep.subr.bf16.mxu0 0
  %942 = vmatpush1.bf16.msra.mxu0 0
  %943 = vmatprep.subr.bf16.mxu0 0
  %944 = vmatpush1.bf16.msra.mxu0 0
  %945 = vmatprep.subr.bf16.mxu0 0
  %946 = vmatpush1.bf16.msra.mxu0 0
  %947 = vmatprep.subr.bf16.mxu0 0
  %948 = vmatpush1.bf16.msra.mxu0 0
  %949 = vmatprep.subr.bf16.mxu0 0
  %950 = vmatpush1.bf16.msra.mxu0 0
  %951 = vmatprep.subr.bf16.mxu0 0
  %952 = vmatpush1.bf16.msra.mxu0 0
  %953 = vmatprep.subr.bf16.mxu0 0
  %954 = vmatpush1.bf16.msra.mxu0 0
  %955 = vmatprep.subr.bf16.mxu0 0
  %956 = vmatpush1.bf16.msra.mxu0 0
  %957 = vmatprep.subr.bf16.mxu0 0
  %958 = vmatpush1.bf16.msra.mxu0 0
  %959 = vmatprep.subr.bf16.mxu0 0
  %960 = vmatpush1.bf16.msra.mxu0 0
  %961 = vmatprep.subr.bf16.mxu0 0
  %962 = vmatpush1.bf16.msra.mxu0 0
  %963 = vmatprep.subr.bf16.mxu0 0
  %964 = vmatpush1.bf16.msra.mxu0 0
  %965 = vmatprep.mubr.bf16.mxu0 0
  %966 = vmatmul.mubr.bf16.gmra.mrb[0].mxu0 %v931
  %v967 = vpop.f32.mrb[0].mxu0
  %v968 = vadd.f32 0.0, %v967
  %v969 = vpop.f32.mrb[0].mxu0
  %v970 = vpop.f32.mrb[0].mxu0
  %v971 = vadd.f32 0.0, %v970
  %v972 = vpop.f32.mrb[0].mxu0
  %973 = vdwg.mxu0
  %v974 = vpack.c.bf16 %v971, %v968
  %975 = vmatprep.subr.bf16.mxu0 0
  %976 = vmatpush1.bf16.msra.mxu0 %v974
  %977 = vmatprep.subr.bf16.mxu0 0
  %978 = vmatpush1.bf16.msra.mxu0 0
  %979 = vmatprep.subr.bf16.mxu0 0
  %980 = vmatpush1.bf16.msra.mxu0 0
  %981 = vmatprep.subr.bf16.mxu0 0
  %982 = vmatpush1.bf16.msra.mxu0 0
  %983 = vmatprep.subr.bf16.mxu0 0
  %984 = vmatpush1.bf16.msra.mxu0 0
  %985 = vmatprep.subr.bf16.mxu0 0
  %986 = vmatpush1.bf16.msra.mxu0 0
  %987 = vmatprep.subr.bf16.mxu0 0
  %988 = vmatpush1.bf16.msra.mxu0 0
  %989 = vmatprep.subr.bf16.mxu0 0
  %990 = vmatpush1.bf16.msra.mxu0 0
  %991 = vmatprep.subr.bf16.mxu0 0
  %992 = vmatpush1.bf16.msra.mxu0 0
  %993 = vmatprep.subr.bf16.mxu0 0
  %994 = vmatpush1.bf16.msra.mxu0 0
  %995 = vmatprep.subr.bf16.mxu0 0
  %996 = vmatpush1.bf16.msra.mxu0 0
  %997 = vmatprep.subr.bf16.mxu0 0
  %998 = vmatpush1.bf16.msra.mxu0 0
  %999 = vmatprep.subr.bf16.mxu0 0
  %1000 = vmatpush1.bf16.msra.mxu0 0
  %1001 = vmatprep.subr.bf16.mxu0 0
  %1002 = vmatpush1.bf16.msra.mxu0 0
  %1003 = vmatprep.subr.bf16.mxu0 0
  %1004 = vmatpush1.bf16.msra.mxu0 0
  %1005 = vmatprep.subr.bf16.mxu0 0
  %1006 = vmatpush1.bf16.msra.mxu0 0
  %1007 = vmatprep.mubr.bf16.mxu0 0
  %1008 = vmatmul.mubr.bf16.gmra.mrb[0].mxu0 %v846
  %v1009 = vpop.f32.mrb[0].mxu0
  %v1010 = vadd.f32 0.0, %v1009
  %v1011 = vpop.f32.mrb[0].mxu0
  %v1012 = vpop.f32.mrb[0].mxu0
  %v1013 = vadd.f32 0.0, %v1012
  %v1014 = vpop.f32.mrb[0].mxu0
  %1015 = vdwg.mxu0
  %v1016 = vmax.f32 %v1010, 0.0
  %v1017 = vmax.f32 %v1013, 0.0
  %v1018 = vmul.f32 %v1016, 0.7
  %v1019 = vmul.f32 %v1017, 0.7
  %v1020 = vmul.f32 %v304, 0.3
  %v1021 = vmul.f32 %v305, 0.3
  %v1022 = vadd.f32 %v1018, %v1020
  %v1023 = vadd.f32 %v1019, %v1021
  %v1024 = vld [vmem:[%s5 + $0xc] sm:$0xf]
  %v1025 = vld [vmem:[%s5 + $0x20] sm:$0xf]
  %v1026 = vld [vmem:[%s5 + $0x34] sm:$0xf]
  %v1027 = vld [vmem:[%s5 + $0x48] sm:$0xf]
  %v1028 = vpack.c.bf16 %v1023, %v1022
  %v1033 = vunpack.c.l.b16 %v1024
  %v1034 = vunpack.c.l.b16 %v1025
  %v1035 = vunpack.c.l.b16 %v1026
  %v1036 = vunpack.c.l.b16 %v1027
  %v1037 = vpack.c.b16 %v1034, %v1033
  %v1038 = vpack.c.b16 %v1036, %v1035
  %v1042 = vsel %vm163, %v1028, 0
  %1044 = vmatprep.subr.bf16.mxu0 0
  %1045 = vmatpush1.bf16.msra.mxu0 %v1037
  %1046 = vmatprep.subr.bf16.mxu0 0
  %1047 = vmatpush1.bf16.msra.mxu0 %v1038
  %1048 = vmatprep.subr.bf16.mxu0 0
  %1049 = vmatpush1.bf16.msra.mxu0 0
  %1050 = vmatprep.subr.bf16.mxu0 0
  %1051 = vmatpush1.bf16.msra.mxu0 0
  %1052 = vmatprep.subr.bf16.mxu0 0
  %1053 = vmatpush1.bf16.msra.mxu0 0
  %1054 = vmatprep.subr.bf16.mxu0 0
  %1055 = vmatpush1.bf16.msra.mxu0 0
  %1056 = vmatprep.subr.bf16.mxu0 0
  %1057 = vmatpush1.bf16.msra.mxu0 0
  %1058 = vmatprep.subr.bf16.mxu0 0
  %1059 = vmatpush1.bf16.msra.mxu0 0
  %1060 = vmatprep.subr.bf16.mxu0 0
  %1061 = vmatpush1.bf16.msra.mxu0 0
  %1062 = vmatprep.subr.bf16.mxu0 0
  %1063 = vmatpush1.bf16.msra.mxu0 0
  %1064 = vmatprep.subr.bf16.mxu0 0
  %1065 = vmatpush1.bf16.msra.mxu0 0
  %1066 = vmatprep.subr.bf16.mxu0 0
  %1067 = vmatpush1.bf16.msra.mxu0 0
  %1068 = vmatprep.subr.bf16.mxu0 0
  %1069 = vmatpush1.bf16.msra.mxu0 0
  %1070 = vmatprep.subr.bf16.mxu0 0
  %1071 = vmatpush1.bf16.msra.mxu0 0
  %1072 = vmatprep.subr.bf16.mxu0 0
  %1073 = vmatpush1.bf16.msra.mxu0 0
  %1074 = vmatprep.subr.bf16.mxu0 0
  %1075 = vmatpush1.bf16.msra.mxu0 0
  %1076 = vmatprep.mubr.bf16.mxu0 0
  %1077 = vmatmul.mubr.bf16.gmra.mrb[0].mxu0 %v1042
  %v1078 = vpop.f32.mrb[0].mxu0
  %v1079 = vadd.f32 0.0, %v1078
  %v1080 = vpop.f32.mrb[0].mxu0
  %v1081 = vpop.f32.mrb[0].mxu0
  %v1082 = vadd.f32 0.0, %v1081
  %v1083 = vpop.f32.mrb[0].mxu0
  %1084 = vdwg.mxu0
  %v1085 = vpack.c.bf16 %v1082, %v1079
  %1086 = vmatprep.subr.bf16.mxu0 0
  %1087 = vmatpush1.bf16.msra.mxu0 %v1085
  %1088 = vmatprep.subr.bf16.mxu0 0
  %1089 = vmatpush1.bf16.msra.mxu0 0
  %1090 = vmatprep.subr.bf16.mxu0 0
  %1091 = vmatpush1.bf16.msra.mxu0 0
  %1092 = vmatprep.subr.bf16.mxu0 0
  %1093 = vmatpush1.bf16.msra.mxu0 0
  %1094 = vmatprep.subr.bf16.mxu0 0
  %1095 = vmatpush1.bf16.msra.mxu0 0
  %1096 = vmatprep.subr.bf16.mxu0 0
  %1097 = vmatpush1.bf16.msra.mxu0 0
  %1098 = vmatprep.subr.bf16.mxu0 0
  %1099 = vmatpush1.bf16.msra.mxu0 0
  %1100 = vmatprep.subr.bf16.mxu0 0
  %1101 = vmatpush1.bf16.msra.mxu0 0
  %1102 = vmatprep.subr.bf16.mxu0 0
  %1103 = vmatpush1.bf16.msra.mxu0 0
  %1104 = vmatprep.subr.bf16.mxu0 0
  %1105 = vmatpush1.bf16.msra.mxu0 0
  %1106 = vmatprep.subr.bf16.mxu0 0
  %1107 = vmatpush1.bf16.msra.mxu0 0
  %1108 = vmatprep.subr.bf16.mxu0 0
  %1109 = vmatpush1.bf16.msra.mxu0 0
  %1110 = vmatprep.subr.bf16.mxu0 0
  %1111 = vmatpush1.bf16.msra.mxu0 0
  %1112 = vmatprep.subr.bf16.mxu0 0
  %1113 = vmatpush1.bf16.msra.mxu0 0
  %1114 = vmatprep.subr.bf16.mxu0 0
  %1115 = vmatpush1.bf16.msra.mxu0 0
  %1116 = vmatprep.subr.bf16.mxu0 0
  %1117 = vmatpush1.bf16.msra.mxu0 0
  %1118 = vmatprep.mubr.bf16.mxu0 0
  %1119 = vmatmul.mubr.bf16.gmra.mrb[0].mxu0 %v846
  %v1120 = vpop.f32.mrb[0].mxu0
  %v1121 = vadd.f32 0.0, %v1120
  %v1122 = vpop.f32.mrb[0].mxu0
  %v1123 = vpop.f32.mrb[0].mxu0
  %v1124 = vadd.f32 0.0, %v1123
  %v1125 = vpop.f32.mrb[0].mxu0
  %1126 = vdwg.mxu0
  %v1127 = vmax.f32 %v1121, 0.0
  %v1128 = vmax.f32 %v1124, 0.0
  %v1129 = vmul.f32 %v1127, 0.7
  %v1130 = vmul.f32 %v1128, 0.7
  %v1131 = vmul.f32 %v374, 0.3
  %v1132 = vmul.f32 %v375, 0.3
  %v1133 = vadd.f32 %v1129, %v1131
  %v1134 = vadd.f32 %v1130, %v1132
  %v1135 = vld [vmem:[%s6 + $0x14] sm:$0xf]
  %v1136 = vld [vmem:[%s6 + $0x2c] sm:$0xf]
  %v1137 = vld [vmem:[%s6 + $0x44] sm:$0xf]
  %v1138 = vld [vmem:[%s6 + $0x5c] sm:$0xf]
  %v1139 = vld [vmem:[%s6 + $0x74] sm:$0xf]
  %v1140 = vld [vmem:[%s6 + $0x8c] sm:$0xf]
  %v1141 = vld [vmem:[%s6 + $0xa4] sm:$0xf]
  %v1142 = vld [vmem:[%s6 + $0xbc] sm:$0xf]
  %v1143 = vpack.c.bf16 %v1134, %v1133
  %v1152 = vunpack.c.l.b16 %v1135
  %v1153 = vunpack.c.l.b16 %v1136
  %v1154 = vunpack.c.l.b16 %v1137
  %v1155 = vunpack.c.l.b16 %v1138
  %v1156 = vunpack.c.l.b16 %v1139
  %v1157 = vunpack.c.l.b16 %v1140
  %v1158 = vunpack.c.l.b16 %v1141
  %v1159 = vunpack.c.l.b16 %v1142
  %v1160 = vpack.c.b16 %v1153, %v1152
  %v1161 = vpack.c.b16 %v1155, %v1154
  %v1162 = vpack.c.b16 %v1157, %v1156
  %v1163 = vpack.c.b16 %v1159, %v1158
  %v1169 = vsel %vm259, %v1143, 0
  %1171 = vmatprep.subr.bf16.mxu0 0
  %1172 = vmatpush1.bf16.msra.mxu0 %v1160
  %1173 = vmatprep.subr.bf16.mxu0 0
  %1174 = vmatpush1.bf16.msra.mxu0 %v1161
  %1175 = vmatprep.subr.bf16.mxu0 0
  %1176 = vmatpush1.bf16.msra.mxu0 %v1162
  %1177 = vmatprep.subr.bf16.mxu0 0
  %1178 = vmatpush1.bf16.msra.mxu0 %v1163
  %1179 = vmatprep.subr.bf16.mxu0 0
  %1180 = vmatpush1.bf16.msra.mxu0 0
  %1181 = vmatprep.subr.bf16.mxu0 0
  %1182 = vmatpush1.bf16.msra.mxu0 0
  %1183 = vmatprep.subr.bf16.mxu0 0
  %1184 = vmatpush1.bf16.msra.mxu0 0
  %1185 = vmatprep.subr.bf16.mxu0 0
  %1186 = vmatpush1.bf16.msra.mxu0 0
  %1187 = vmatprep.subr.bf16.mxu0 0
  %1188 = vmatpush1.bf16.msra.mxu0 0
  %1189 = vmatprep.subr.bf16.mxu0 0
  %1190 = vmatpush1.bf16.msra.mxu0 0
  %1191 = vmatprep.subr.bf16.mxu0 0
  %1192 = vmatpush1.bf16.msra.mxu0 0
  %1193 = vmatprep.subr.bf16.mxu0 0
  %1194 = vmatpush1.bf16.msra.mxu0 0
  %1195 = vmatprep.subr.bf16.mxu0 0
  %1196 = vmatpush1.bf16.msra.mxu0 0
  %1197 = vmatprep.subr.bf16.mxu0 0
  %1198 = vmatpush1.bf16.msra.mxu0 0
  %1199 = vmatprep.subr.bf16.mxu0 0
  %1200 = vmatpush1.bf16.msra.mxu0 0
  %1201 = vmatprep.subr.bf16.mxu0 0
  %1202 = vmatpush1.bf16.msra.mxu0 0
  %1203 = vmatprep.mubr.bf16.mxu0 0
  %1204 = vmatmul.mubr.bf16.gmra.mrb[0].mxu0 %v1169
  %v1205 = vpop.f32.mrb[0].mxu0
  %v1206 = vadd.f32 0.0, %v1205
  %v1207 = vpop.f32.mrb[0].mxu0
  %v1208 = vpop.f32.mrb[0].mxu0
  %v1209 = vadd.f32 0.0, %v1208
  %v1210 = vpop.f32.mrb[0].mxu0
  %1211 = vdwg.mxu0
  %v1212 = vpack.c.bf16 %v1209, %v1206
  %1213 = vmatprep.subr.bf16.mxu0 0
  %1214 = vmatpush1.bf16.msra.mxu0 %v1212
  %1215 = vmatprep.subr.bf16.mxu0 0
  %1216 = vmatpush1.bf16.msra.mxu0 0
  %1217 = vmatprep.subr.bf16.mxu0 0
  %1218 = vmatpush1.bf16.msra.mxu0 0
  %1219 = vmatprep.subr.bf16.mxu0 0
  %1220 = vmatpush1.bf16.msra.mxu0 0
  %1221 = vmatprep.subr.bf16.mxu0 0
  %1222 = vmatpush1.bf16.msra.mxu0 0
  %1223 = vmatprep.subr.bf16.mxu0 0
  %1224 = vmatpush1.bf16.msra.mxu0 0
  %1225 = vmatprep.subr.bf16.mxu0 0
  %1226 = vmatpush1.bf16.msra.mxu0 0
  %1227 = vmatprep.subr.bf16.mxu0 0
  %1228 = vmatpush1.bf16.msra.mxu0 0
  %1229 = vmatprep.subr.bf16.mxu0 0
  %1230 = vmatpush1.bf16.msra.mxu0 0
  %1231 = vmatprep.subr.bf16.mxu0 0
  %1232 = vmatpush1.bf16.msra.mxu0 0
  %1233 = vmatprep.subr.bf16.mxu0 0
  %1234 = vmatpush1.bf16.msra.mxu0 0
  %1235 = vmatprep.subr.bf16.mxu0 0
  %1236 = vmatpush1.bf16.msra.mxu0 0
  %1237 = vmatprep.subr.bf16.mxu0 0
  %1238 = vmatpush1.bf16.msra.mxu0 0
  %1239 = vmatprep.subr.bf16.mxu0 0
  %1240 = vmatpush1.bf16.msra.mxu0 0
  %1241 = vmatprep.subr.bf16.mxu0 0
  %1242 = vmatpush1.bf16.msra.mxu0 0
  %1243 = vmatprep.subr.bf16.mxu0 0
  %1244 = vmatpush1.bf16.msra.mxu0 0
  %1245 = vmatprep.mubr.bf16.mxu0 0
  %1246 = vmatmul.mubr.bf16.gmra.mrb[0].mxu0 %v846
  %v1247 = vpop.f32.mrb[0].mxu0
  %v1248 = vadd.f32 0.0, %v1247
  %v1249 = vpop.f32.mrb[0].mxu0
  %v1250 = vpop.f32.mrb[0].mxu0
  %v1251 = vadd.f32 0.0, %v1250
  %v1252 = vpop.f32.mrb[0].mxu0
  %1253 = vdwg.mxu0
  %v1254 = vmul.f32 %v1248, 0.7
  %v1255 = vmul.f32 %v1251, 0.7
  %v1256 = vmul.f32 %v454, 0.3
  %v1257 = vmul.f32 %v457, 0.3
  %v1258 = vadd.f32 %v1254, %v1256
  %v1259 = vadd.f32 %v1255, %v1257
  %v1260 = vld [vmem:[%s4 + $0x4] sm:$0xf]
  %v1261 = vld [vmem:[%s4 + $0xc] sm:$0xf]
  %v1262 = vpack.c.bf16 %v1259, %v1258
  %v1263 = vld [vmem:[%s7 + $0x8] sm:$0x1]
  %v1265 = vlaneseq
  %v1266 = vshrl.u32 %v1265, 7
  %v1267 = vsub.s32 0, %v1266
  %v1268 = vrot.slane %v1263, %v1267
  %v1272 = vunpack.c.l.b16 %v1260
  %v1273 = vunpack.c.l.b16 %v1261
  %v1274 = vpack.c.b16 %v1273, %v1272
  %v1277 = vsel %vm476, %v1262, 0
  %1279 = vmatprep.subr.bf16.mxu0 0
  %1280 = vmatpush1.bf16.msra.mxu0 %v1274
  %1281 = vmatprep.subr.bf16.mxu0 0
  %1282 = vmatpush1.bf16.msra.mxu0 0
  %1283 = vmatprep.subr.bf16.mxu0 0
  %1284 = vmatpush1.bf16.msra.mxu0 0
  %1285 = vmatprep.subr.bf16.mxu0 0
  %1286 = vmatpush1.bf16.msra.mxu0 0
  %1287 = vmatprep.subr.bf16.mxu0 0
  %1288 = vmatpush1.bf16.msra.mxu0 0
  %1289 = vmatprep.subr.bf16.mxu0 0
  %1290 = vmatpush1.bf16.msra.mxu0 0
  %1291 = vmatprep.subr.bf16.mxu0 0
  %1292 = vmatpush1.bf16.msra.mxu0 0
  %1293 = vmatprep.subr.bf16.mxu0 0
  %1294 = vmatpush1.bf16.msra.mxu0 0
  %1295 = vmatprep.subr.bf16.mxu0 0
  %1296 = vmatpush1.bf16.msra.mxu0 0
  %1297 = vmatprep.subr.bf16.mxu0 0
  %1298 = vmatpush1.bf16.msra.mxu0 0
  %1299 = vmatprep.subr.bf16.mxu0 0
  %1300 = vmatpush1.bf16.msra.mxu0 0
  %1301 = vmatprep.subr.bf16.mxu0 0
  %1302 = vmatpush1.bf16.msra.mxu0 0
  %1303 = vmatprep.subr.bf16.mxu0 0
  %1304 = vmatpush1.bf16.msra.mxu0 0
  %1305 = vmatprep.subr.bf16.mxu0 0
  %1306 = vmatpush1.bf16.msra.mxu0 0
  %1307 = vmatprep.subr.bf16.mxu0 0
  %1308 = vmatpush1.bf16.msra.mxu0 0
  %1309 = vmatprep.subr.bf16.mxu0 0
  %1310 = vmatpush1.bf16.msra.mxu0 0
  %1311 = vmatprep.mubr.bf16.mxu0 0
  %1312 = vmatmul.mubr.bf16.gmra.mrb[0].mxu0 %v1277
  %v1313 = vpop.f32.mrb[0].mxu0
  %v1314 = vadd.f32 %v1268, %v1313
  %v1315 = vpop.f32.mrb[0].mxu0
  %v1316 = vpop.f32.mrb[0].mxu0
  %v1317 = vadd.f32 %v1268, %v1316
  %v1318 = vpop.f32.mrb[0].mxu0
  %1319 = vdwg.mxu0
  %vm1320 = vcmask 64512
  %v1321 = vsel %vm1320, %v1314, -inf
  %1322 = vmax.xlane.f32.xlu0 %v1321
  %v1323 = vpop.xlane.xlu0 %1322
  %v1324 = vsel %vm1320, %v1317, -inf
  %1325 = vmax.xlane.f32.xlu0 %v1324
  %v1326 = vpop.xlane.xlu0 %1325
  %v1327 = vsub.f32 %v1314, %v1323
  %v1328 = vsub.f32 %v1317, %v1326
  %v1329 = vmul.f32 %v1327, 1.442695
  %v1330 = vpow.pop %v1329
  %v1331 = vmul.f32 %v1328, 1.442695
  %v1332 = vpow.pop %v1331
  %v1333 = vsel %vm1320, %v1330, 0.0
  %1334 = vadd.xlane.f32.xlu0 %v1333
  %v1335 = vpop.xlane.xlu0 %1334
  %v1336 = vsel %vm1320, %v1332, 0.0
  %1337 = vadd.xlane.f32.xlu0 %v1336
  %v1338 = vpop.xlane.xlu0 %1337
  %v1339 = vrcp.pop %v1335
  %v1340 = vrcp.pop %v1338
  %v1341 = vmul.f32 %v1330, %v1339
  %v1342 = vmul.f32 %v1332, %v1340
  %1345 = vrot.lane.b32.xlu0 %v454, 8
  %v1346 = vpop.permute.xlu0 %1345
  %1347 = vrot.lane.b32.xlu0 %v457, 8
  %v1348 = vpop.permute.xlu0 %1347
  %1353 = vrot.lane.b32.xlu0 %v140, 24
  %v1354 = vpop.permute.xlu0 %1353
  %1355 = vrot.lane.b32.xlu0 %v143, 24
  %v1356 = vpop.permute.xlu0 %1355
  %v1359 = vsel %vm1320, %v1341, %v1346
  %v1360 = vsel %vm1320, %v1342, %v1348
  %vm1361 = vcmask 195584
  %v1362 = vsel %vm1361, %v1359, %v1354
  %v1363 = vsel %vm1361, %v1360, %v1356
  %vm1364 = vcmask 457728
  %v1365 = vsel %vm1364, %v1362, 0.0
  %v1366 = vsel %vm1364, %v1363, 0.0
  %1367 = vst [vmem:[%s8] sm:$0xff] %v827
  %1368 = vst [vmem:[%s8 + $0x10] sm:$0xff] %v830
  %1369 = vst [vmem:[%s8 + $0x8] sm:$0xff] %v1365
  %1370 = vst [vmem:[%s8 + $0x18] sm:$0xff] %v1366
  // Predicated region
  $region34: #{sdcn_forward.1} parent=0 // pred_check
    _
  $region35: #{sdcn_forward.1} parent=0 // pred_check_branch
    %1372 = sbr.rel (0) target = $region37
  $region36: #{sdcn_forward.1} parent=0 // pred_region
    _
  $region37: #{sdcn_forward.1} parent=0 // pred_fallthru
    _
  // Predicated region
  $region38: #{sdcn_forward.1} parent=0 // pred_check
    _
  $region39: #{sdcn_forward.1} parent=0 // pred_check_branch
    %1374 = sbr.rel (0) target = $region41
  $region40: #{sdcn_forward.1} parent=0 // pred_region
    _
  $region41: #{sdcn_forward.1} parent=0 // pred_fallthru
    _

</llo_original>
